<compile_context>
chip_gen: v7x
topology: tpu7x:2x2x1
jax: 0.10.0
libtpu: 0.0.40
codegen_flags: <defaults>
</compile_context>

<pallas_src>
import functools
import math

import jax
import jax.numpy as jnp
from jax.experimental import pallas as pl
from jax.experimental.pallas import tpu as pltpu


def _posenc_kernel(scale_ref, x_ref, o_ref, *, num_freqs, include_input):
    """Feature-major positional encoding for one lane tile.

    scale_ref: (num_freqs*D, 1) f32 — row k*D+j holds freq_k (broadcast over lanes)
    x_ref:     (D, T)          — input coords, N on the lane axis
    o_ref:     (out_dim, T)    — rows ordered [x, sin(f0 x), cos(f0 x), sin(f1 x), ...]
    """
    x = x_ref[...].astype(jnp.float32)                  # (D, T), math in f32
    d = x.shape[0]

    # Build one (num_freqs*D, T) slab of arguments: sublane-axis tiling of x
    # times the per-row frequency vector. Then issue ONE big sin and ONE big
    # cos push (keeps the EUP pipeline full, exact same numerics as reference).
    xt = jnp.concatenate([x] * num_freqs, axis=0)       # (F*D, T)
    args = scale_ref[...] * xt                          # (F*D, T), lane-broadcast scale
    s = jnp.sin(args)
    c = jnp.cos(args)

    parts = []
    if include_input:
        parts.append(x)
    for k in range(num_freqs):                          # static Python unroll
        parts.append(s[k * d:(k + 1) * d, :])
        parts.append(c[k * d:(k + 1) * d, :])

    # Single full-slab store; all writes are full-lane (no masked vst.msk),
    # concatenation is along the sublane axis only (no cross-lane shuffles).
    o_ref[...] = jnp.concatenate(parts, axis=0).astype(o_ref.dtype)


def positional_encoding(x, *, num_freqs=10, include_input=True,
                        max_tile_n=4096, out_dtype=None):
    """NeRF positional encoding.

    x: (N, D) float array -> (N, D * (2*num_freqs + include_input)).
    out_dtype: optional narrower output dtype (e.g. jnp.bfloat16) if the
               downstream MLP accepts it; defaults to x.dtype (exact semantics).
    """
    N, D = x.shape
    out_dtype = x.dtype if out_dtype is None else out_dtype
    out_dim = D * (2 * num_freqs + (1 if include_input else 0))

    # Frequencies: 2**linspace(0, num_freqs-1) == exact powers of two.
    freqs = 2.0 ** jnp.arange(num_freqs, dtype=jnp.float32)          # (F,)
    scale = jnp.repeat(freqs, D).reshape(num_freqs * D, 1)           # (F*D, 1)

    # Feature-major view of the input (tiny: D*N elements).
    xt = jnp.transpose(x)                                            # (D, N)

    # Lane-axis tiling: big tiles (>= ~2k lanes) amortize the ~0.35us/step
    # overhead; 4096 keeps double-buffered blocks + intermediates comfortably
    # inside v5e's 16 MiB scoped VMEM and v7x's 64 MiB physical VMEM.
    # Non-divisible N is handled by a ragged last block (no pad / out[:N]).
    tile_n = N if N <= max_tile_n else max_tile_n
    grid = (pl.cdiv(N, tile_n),)

    kernel = functools.partial(
        _posenc_kernel, num_freqs=num_freqs, include_input=include_input
    )

    out_t = pl.pallas_call(
        kernel,
        out_shape=jax.ShapeDtypeStruct((out_dim, N), out_dtype),
        grid_spec=pltpu.PrefetchScalarGridSpec(
            num_scalar_prefetch=0,
            grid=grid,
            in_specs=[
                # Tiny constant vector, same block every step.
                pl.BlockSpec((num_freqs * D, 1), lambda i: (0, 0)),
                # Input coords, N on the lane axis.
                pl.BlockSpec((D, tile_n), lambda i: (0, i)),
            ],
            # Lane-dense output slab.
            out_specs=pl.BlockSpec((out_dim, tile_n), lambda i: (0, i)),
        ),
        compiler_params=pltpu.CompilerParams(
            dimension_semantics=("parallel",),
        ),
    )(scale, xt)

    # Back to the module's (N, out_dim) convention (cheap XLA transpose).
    return jnp.transpose(out_t)


def _reference(x, num_freqs=10, include_input=True):
    freq_bands = 2.0 ** jnp.linspace(0.0, num_freqs - 1, num_freqs)
    parts = []
    if include_input:
        parts.append(x)
    for f in freq_bands:
        parts.append(jnp.sin(f * x))
        parts.append(jnp.cos(f * x))
    return jnp.concatenate(parts, axis=-1)


if __name__ == "__main__":
    key = jax.random.PRNGKey(0)
    N, D = 256, 3  # NeRF-style 3D coordinates
    x = jax.random.uniform(key, (N, D), dtype=jnp.float32, minval=-1.0, maxval=1.0)

    out = positional_encoding(x, num_freqs=10, include_input=True)
    out = jax.block_until_ready(out)

    ref = _reference(x, num_freqs=10, include_input=True)
    assert out.shape == (N, D * (2 * 10 + 1)), out.shape
    assert jnp.allclose(out, ref, atol=1e-4, rtol=1e-4), "mismatch vs reference"

    # Also exercise a lane-ragged, multi-tile case (no pad/slice round trip).
    N2 = 300
    x2 = jax.random.uniform(jax.random.PRNGKey(1), (N2, D), dtype=jnp.float32)
    out2 = jax.block_until_ready(
        positional_encoding(x2, num_freqs=10, include_input=True, max_tile_n=128)
    )
    assert jnp.allclose(out2, _reference(x2), atol=1e-4, rtol=1e-4), "ragged mismatch"

    print("KERNEL_OK")
</pallas_src>

<mosaic_0001>
module attributes {stable_mosaic.version = 11 : i64} {
  func.func @_posenc_kernel(%arg0: i32, %arg1: memref<30x1xf32, #tpu.memory_space<vmem>>, %arg2: memref<3x256xf32, #tpu.memory_space<vmem>>, %arg3: memref<63x256xf32, #tpu.memory_space<vmem>>) attributes {dimension_semantics = [#tpu.dimension_semantics<parallel>], iteration_bounds = array<i64: 1>, scalar_prefetch = 0 : i64, scratch_operands = 0 : i64, tpu.core_type = #tpu.core_type<tc>, window_params = [{pipeline_mode = #tpu.pipeline_mode<synchronous>, transform_indices = @transform_0, window_bounds = array<i64: 30, 1>}, {transform_indices = @transform_1, window_bounds = array<i64: 3, 256>}, {transform_indices = @transform_2, window_bounds = array<i64: 63, 256>}]} {
    %c0 = arith.constant 0 : index
    %c0_0 = arith.constant 0 : index
    %0 = vector.load %arg2[%c0, %c0_0] : memref<3x256xf32, #tpu.memory_space<vmem>>, vector<3x256xf32>
    %1 = tpu.concatenate %0, %0, %0, %0, %0, %0, %0, %0, %0, %0 in 0 : vector<3x256xf32>, vector<3x256xf32>, vector<3x256xf32>, vector<3x256xf32>, vector<3x256xf32>, vector<3x256xf32>, vector<3x256xf32>, vector<3x256xf32>, vector<3x256xf32>, vector<3x256xf32> -> vector<30x256xf32>
    %c0_1 = arith.constant 0 : index
    %c0_2 = arith.constant 0 : index
    %2 = vector.load %arg1[%c0_1, %c0_2] : memref<30x1xf32, #tpu.memory_space<vmem>>, vector<30x1xf32>
    %3 = vector.broadcast %2 : vector<30x1xf32> to vector<30x256xf32>
    %4 = arith.mulf %3, %1 : vector<30x256xf32>
    %5 = math.sin %4 : vector<30x256xf32>
    %6 = math.cos %4 : vector<30x256xf32>
    %7 = vector.extract_strided_slice %5 {offsets = [0, 0], sizes = [3, 256], strides = [1, 1]} : vector<30x256xf32> to vector<3x256xf32>
    %8 = vector.extract_strided_slice %6 {offsets = [0, 0], sizes = [3, 256], strides = [1, 1]} : vector<30x256xf32> to vector<3x256xf32>
    %9 = vector.extract_strided_slice %5 {offsets = [3, 0], sizes = [3, 256], strides = [1, 1]} : vector<30x256xf32> to vector<3x256xf32>
    %10 = vector.extract_strided_slice %6 {offsets = [3, 0], sizes = [3, 256], strides = [1, 1]} : vector<30x256xf32> to vector<3x256xf32>
    %11 = vector.extract_strided_slice %5 {offsets = [6, 0], sizes = [3, 256], strides = [1, 1]} : vector<30x256xf32> to vector<3x256xf32>
    %12 = vector.extract_strided_slice %6 {offsets = [6, 0], sizes = [3, 256], strides = [1, 1]} : vector<30x256xf32> to vector<3x256xf32>
    %13 = vector.extract_strided_slice %5 {offsets = [9, 0], sizes = [3, 256], strides = [1, 1]} : vector<30x256xf32> to vector<3x256xf32>
    %14 = vector.extract_strided_slice %6 {offsets = [9, 0], sizes = [3, 256], strides = [1, 1]} : vector<30x256xf32> to vector<3x256xf32>
    %15 = vector.extract_strided_slice %5 {offsets = [12, 0], sizes = [3, 256], strides = [1, 1]} : vector<30x256xf32> to vector<3x256xf32>
    %16 = vector.extract_strided_slice %6 {offsets = [12, 0], sizes = [3, 256], strides = [1, 1]} : vector<30x256xf32> to vector<3x256xf32>
    %17 = vector.extract_strided_slice %5 {offsets = [15, 0], sizes = [3, 256], strides = [1, 1]} : vector<30x256xf32> to vector<3x256xf32>
    %18 = vector.extract_strided_slice %6 {offsets = [15, 0], sizes = [3, 256], strides = [1, 1]} : vector<30x256xf32> to vector<3x256xf32>
    %19 = vector.extract_strided_slice %5 {offsets = [18, 0], sizes = [3, 256], strides = [1, 1]} : vector<30x256xf32> to vector<3x256xf32>
    %20 = vector.extract_strided_slice %6 {offsets = [18, 0], sizes = [3, 256], strides = [1, 1]} : vector<30x256xf32> to vector<3x256xf32>
    %21 = vector.extract_strided_slice %5 {offsets = [21, 0], sizes = [3, 256], strides = [1, 1]} : vector<30x256xf32> to vector<3x256xf32>
    %22 = vector.extract_strided_slice %6 {offsets = [21, 0], sizes = [3, 256], strides = [1, 1]} : vector<30x256xf32> to vector<3x256xf32>
    %23 = vector.extract_strided_slice %5 {offsets = [24, 0], sizes = [3, 256], strides = [1, 1]} : vector<30x256xf32> to vector<3x256xf32>
    %24 = vector.extract_strided_slice %6 {offsets = [24, 0], sizes = [3, 256], strides = [1, 1]} : vector<30x256xf32> to vector<3x256xf32>
    %25 = vector.extract_strided_slice %5 {offsets = [27, 0], sizes = [3, 256], strides = [1, 1]} : vector<30x256xf32> to vector<3x256xf32>
    %26 = vector.extract_strided_slice %6 {offsets = [27, 0], sizes = [3, 256], strides = [1, 1]} : vector<30x256xf32> to vector<3x256xf32>
    %27 = tpu.concatenate %0, %7, %8, %9, %10, %11, %12, %13, %14, %15, %16, %17, %18, %19, %20, %21 in 0 : vector<3x256xf32>, vector<3x256xf32>, vector<3x256xf32>, vector<3x256xf32>, vector<3x256xf32>, vector<3x256xf32>, vector<3x256xf32>, vector<3x256xf32>, vector<3x256xf32>, vector<3x256xf32>, vector<3x256xf32>, vector<3x256xf32>, vector<3x256xf32>, vector<3x256xf32>, vector<3x256xf32>, vector<3x256xf32> -> vector<48x256xf32>
    %28 = tpu.concatenate %22, %23, %24, %25, %26 in 0 : vector<3x256xf32>, vector<3x256xf32>, vector<3x256xf32>, vector<3x256xf32>, vector<3x256xf32> -> vector<15x256xf32>
    %29 = tpu.concatenate %27, %28 in 0 : vector<48x256xf32>, vector<15x256xf32> -> vector<63x256xf32>
    %c0_3 = arith.constant 0 : index
    %c0_4 = arith.constant 0 : index
    %30 = vector.load %arg3[%c0_3, %c0_4] : memref<63x256xf32, #tpu.memory_space<vmem>>, vector<63x256xf32>
    tpu.vector_store %arg3[%c0_3, %c0_4], %29 {strides = array<i32>} : memref<63x256xf32, #tpu.memory_space<vmem>>, vector<63x256xf32>,
    return
  }
  func.func @transform_0(%arg0: i32) -> (i32, i32) {
    %c0_i32 = arith.constant 0 : i32
    %c0_i32_0 = arith.constant 0 : i32
    %c0_i32_1 = arith.constant 0 : i32
    return %c0_i32, %c0_i32_0 : i32, i32
  }
  func.func @transform_1(%arg0: i32) -> (i32, i32) {
    %c0_i32 = arith.constant 0 : i32
    %c0_i32_0 = arith.constant 0 : i32
    return %c0_i32, %arg0 : i32, i32
  }
  func.func @transform_2(%arg0: i32) -> (i32, i32) {
    %c0_i32 = arith.constant 0 : i32
    %c0_i32_0 = arith.constant 0 : i32
    return %c0_i32, %arg0 : i32, i32
  }
}

</mosaic_0001>

<llo_original>
// kernel: tpu_custom_call.1
$region0: #{tpu_custom_call.1}
  #allocation0 [shape = 'u32[]', space=smem, size = 0x4, offset = 0x4, fixed_abs, tag = 'smem constant byte address 0x4 - core index']
  #allocation1 [shape = 'u32[144,128]{1,0:T(1,128)}', space=vmem, size = 0x12000, scoped, tag = 'internal scratch']
  %s0 = inlined_call_operand.vmem [shape: f32[30,1], index: 0, kind: input, shape index: {}]
  %s1 = inlined_call_operand.vmem [shape: f32[3,256], index: 1, kind: input, shape index: {}]
  %s2 = inlined_call_operand.hbm [shape: f32[63,256], index: 2, kind: output, shape index: {}]
  %s3 = sld [smem:[#allocation0]]
  $region18: #{tpu_custom_call.1} parent=0
    _
  %s5 = ssub.s32 1, %s3
  %s6 = scalar_select 0, %s5, %s3
  $region1: #{tpu_custom_call.1} parent=0
    #allocation2 [shape = 'u8[65536]{0}', space=vmem, size = 0x10000, scoped, tag = 'output window, operand 0, single buffered']
    #allocation3 [shape = 's32[1]{0}', space=sflag, size = 0x4, scoped, tag = 'scoped memory for tpu_custom_call.1']
    %7 = vsyncpa [#allocation3], 0
    // Predicated region
    $region2: #{tpu_custom_call.1} parent=1 // pred_check
      _
    $region3: #{tpu_custom_call.1} parent=1 // pred_check_branch
      %9 = sbr.rel (0) target = $region5
    $region4: #{tpu_custom_call.1} parent=1 // pred_region
      _
    $region5: #{tpu_custom_call.1} parent=1 // pred_fallthru
      _
    // Predicated region
    $region6: #{tpu_custom_call.1} parent=1 // pred_check
      _
    $region7: #{tpu_custom_call.1} parent=1 // pred_check_branch
      %11 = sbr.rel (0) target = $region9
    $region8: #{tpu_custom_call.1} parent=1 // pred_region
      _
    $region9: #{tpu_custom_call.1} parent=1 // pred_fallthru
      _
    %v12 = vld [vmem:[%s1] sm:$0x77]
    %v14 = vcombine.high %v12, %v12
    %v16 = vrot.slane %v12, 5
    %v17 = vrot.slane %v14, 5
    %v20 = vrot.slane %v12, 2
    %v21 = vrot.slane %v14, 2
    %v24 = vrot.slane %v12, 7
    %v25 = vrot.slane %v14, 7
    %v28 = vcombine.low %v12, %v12
    %v30 = vrot.slane %v12, 1
    %v31 = vrot.slane %v14, 1
    %v34 = vrot.slane %v12, 6
    %v35 = vrot.slane %v14, 6
    %v38 = vrot.slane %v12, 3
    %v39 = vrot.slane %v14, 3
    %vm42 = vcmask 1042432
    %v43 = vsel %vm42, %v12, %v16
    %v44 = vsel %vm42, %v14, %v17
    %vm45 = vcmask 1045504
    %v46 = vsel %vm45, %v43, %v20
    %v47 = vsel %vm45, %v44, %v21
    %vm48 = vcmask 1040384
    %v49 = vsel %vm48, %v20, %v24
    %v50 = vsel %vm48, %v21, %v25
    %vm51 = vcmask 1043456
    %v52 = vsel %vm51, %v49, %v28
    %v53 = vsel %vm51, %v50, %v12
    %vm54 = vcmask 1046528
    %v55 = vsel %vm54, %v52, %v30
    %v56 = vsel %vm54, %v53, %v31
    %vm57 = vcmask 1041408
    %v58 = vsel %vm57, %v30, %v34
    %v59 = vsel %vm57, %v31, %v35
    %vm60 = vcmask 1044480
    %v61 = vsel %vm60, %v58, %v38
    %v62 = vsel %vm60, %v59, %v39
    %v63 = vld [vmem:[%s0] sm:$0xff]
    %v64 = vld [vmem:[%s0 + $0x8] sm:$0xff]
    %v65 = vld [vmem:[%s0 + $0x10] sm:$0xff]
    %v66 = vld [vmem:[%s0 + $0x18] sm:$0x3f]
    %68 = vset.pattern.permute.xlu0 0
    %69 = vperm.xlu0 %68, %v63
    %v70 = vpop.permute.xlu0 %69
    %73 = vset.pattern.permute.xlu0 0
    %74 = vperm.xlu0 %73, %v64
    %v75 = vpop.permute.xlu0 %74
    %78 = vset.pattern.permute.xlu0 0
    %79 = vperm.xlu0 %78, %v65
    %v80 = vpop.permute.xlu0 %79
    %83 = vset.pattern.permute.xlu0 0
    %84 = vperm.xlu0 %83, %v66
    %v85 = vpop.permute.xlu0 %84
    %v87 = vmul.f32 %v70, %v46
    %v88 = vmul.f32 %v70, %v47
    %v89 = vmul.f32 %v75, %v55
    %v90 = vmul.f32 %v75, %v56
    %v91 = vmul.f32 %v80, %v61
    %v92 = vmul.f32 %v80, %v62
    %v93 = vmul.f32 %v85, %v43
    %v94 = vmul.f32 %v85, %v44
    %v95 = vand.u32 2147483647, %v87
    %vm96 = vcmp.le.f32.partialorder %v95, 0.7853982
    %vm97 = vcmp.lt.s32.totalorder %v87, 0
    %v98 = vand.u32 %v87, 2139095040
    %v99 = vshrl.u32 %v98, 23
    %v100 = vsub.s32 %v99, 127
    %v101 = vand.u32 2147483647, %v87
    %v102 = vand.u32 %v101, 8388607
    %v103 = vor.u32 %v102, 8388608
    %v104 = vsub.s32 0, %v103
    %v105 = vadd.s32 %v100, 1
    %vm106 = vcmp.gt.s32.totalorder %v105, 0
    %v107 = vsel %vm106, %v105, 0
    %v108 = vshrl.u32 %v107, 5
    %v109 = vand.u32 %v107, 31
    %v110 = vsub.s32 32, %v109
    %v111 = vshrl.u32 683565275, %v110
    %v112 = vshll.u32 683565275, %v109
    %v113 = vshrl.u32 2475754826, %v110
    %v114 = vor.u32 %v112, %v113
    %v115 = vshll.u32 2475754826, %v109
    %v116 = vshrl.u32 2131351028, %v110
    %v117 = vor.u32 %v115, %v116
    %v118 = vshll.u32 2131351028, %v109
    %v119 = vshrl.u32 2102212464, %v110
    %v120 = vor.u32 %v118, %v119
    %v121 = vshll.u32 2102212464, %v109
    %v122 = vshrl.u32 920167782, %v110
    %v123 = vor.u32 %v121, %v122
    %v124 = vshll.u32 920167782, %v109
    %v125 = vshrl.u32 1326507024, %v110
    %v126 = vor.u32 %v124, %v125
    %vm127 = vcmp.lt.s32.totalorder %v108, 1
    %vm128 = vcmp.lt.s32.totalorder %v108, 2
    %vm129 = vcmp.lt.s32.totalorder %v108, 3
    %vm130 = vcmp.lt.s32.totalorder %v108, 4
    %v131 = vsel %vm127, %v111, %v114
    %v132 = vsel %vm130, %v120, 2102212464
    %v133 = vsel %vm129, %v117, %v132
    %v134 = vsel %vm128, %v131, %v133
    %v135 = vsel %vm127, %v114, %v117
    %v136 = vsel %vm130, %v123, 920167782
    %v137 = vsel %vm129, %v120, %v136
    %v138 = vsel %vm128, %v135, %v137
    %v139 = vsel %vm127, %v117, %v120
    %v140 = vsel %vm130, %v126, 1326507024
    %v141 = vsel %vm129, %v123, %v140
    %v142 = vsel %vm128, %v139, %v141
    %v143 = vshll.u32 %v103, 8
    %v144 = vmul.u32.u64.compose %v143, %v142
    %v145 = vextract.low.u32 %v144
    %v146 = vextract.high.u32 %v144
    %v147 = vmul.u32.u64.compose %v143, %v138
    %v148 = vextract.low.u32 %v147
    %v149 = vextract.high.u32 %v147
    %v150 = vmul.u32 %v143, %v134
    %v151 = vadd.s32 %v146, %v148
    %vm152 = vc.u32 %v146, %v148
    %v153 = vadd.s32 %v149, 1
    %v154 = vsel %vm152, %v153, %v149
    %v155 = vadd.s32 %v150, %v154
    %v156 = vadd.s32 %v155, 536870912
    %v157 = vshrl.u32 %v156, 30
    %v158 = vshll.u32 %v157, 30
    %v159 = vsub.s32 %v155, %v158
    %vm160 = vcmp.lt.s32.totalorder %v159, 0
    %v161 = vsub.s32 0, %v159
    %v162 = vsel %vm160, %v161, %v159
    %v163 = vclz %v162
    %v164 = vsub.s32 %v163, 2
    %vm165 = vcmp.gt.s32.totalorder 0, %v164
    %v166 = vsel %vm165, 0, %v164
    %v167 = vsub.s32 32, %v166
    %v168 = vshll.u32 %v159, %v166
    %v169 = vshrl.u32 %v151, %v167
    %v170 = vor.u32 %v168, %v169
    %v171 = vsub.s32 4294967266, %v166
    %v172 = vadd.s32 %v171, 127
    %v173 = vshll.u32 %v172, 23
    %v174 = vor.u32 4788187, %v173
    %v175 = vand.u32 2147483647, %v174
    %v177 = vcvt.s32.f32 %v170
    %v178 = vmul.f32 %v177, %v175
    %v179 = vxor.u32 %v178, 2147483648
    %v180 = vsel %vm97, %v179, %v178
    %v181 = vsub.s32 4, %v157
    %v182 = vsel %vm97, %v181, %v157
    %v183 = vsel %vm96, %v87, %v180
    %v184 = vsel %vm96, 0, %v182
    %v185 = vcosq.f32.pop %v183
    %v186 = vsinq.f32.pop %v183
    %vm187 = vweird.f32 %v87
    %v188 = vadd.s32 %v184, 3
    %v189 = vand.u32 %v188, 3
    %vm190 = vcmp.lt.s32.totalorder %v189, 2
    %vm191 = vcmp.eq.s32.totalorder %v189, 0
    %v192 = vxor.u32 %v186, 2147483648
    %v193 = vsel %vm191, %v185, %v192
    %vm194 = vcmp.eq.s32.totalorder %v189, 2
    %v195 = vxor.u32 %v185, 2147483648
    %v196 = vsel %vm194, %v195, %v186
    %v197 = vsel %vm190, %v193, %v196
    %v198 = vsel %vm187, nan, %v197
    %v199 = vand.u32 2147483647, %v88
    %vm200 = vcmp.le.f32.partialorder %v199, 0.7853982
    %vm201 = vcmp.lt.s32.totalorder %v88, 0
    %v202 = vand.u32 %v88, 2139095040
    %v203 = vshrl.u32 %v202, 23
    %v204 = vsub.s32 %v203, 127
    %v205 = vand.u32 2147483647, %v88
    %v206 = vand.u32 %v205, 8388607
    %v207 = vor.u32 %v206, 8388608
    %v208 = vsub.s32 0, %v207
    %v209 = vadd.s32 %v204, 1
    %vm210 = vcmp.gt.s32.totalorder %v209, 0
    %v211 = vsel %vm210, %v209, 0
    %v212 = vshrl.u32 %v211, 5
    %v213 = vand.u32 %v211, 31
    %v214 = vsub.s32 32, %v213
    %v215 = vshrl.u32 683565275, %v214
    %v216 = vshll.u32 683565275, %v213
    %v217 = vshrl.u32 2475754826, %v214
    %v218 = vor.u32 %v216, %v217
    %v219 = vshll.u32 2475754826, %v213
    %v220 = vshrl.u32 2131351028, %v214
    %v221 = vor.u32 %v219, %v220
    %v222 = vshll.u32 2131351028, %v213
    %v223 = vshrl.u32 2102212464, %v214
    %v224 = vor.u32 %v222, %v223
    %v225 = vshll.u32 2102212464, %v213
    %v226 = vshrl.u32 920167782, %v214
    %v227 = vor.u32 %v225, %v226
    %v228 = vshll.u32 920167782, %v213
    %v229 = vshrl.u32 1326507024, %v214
    %v230 = vor.u32 %v228, %v229
    %vm231 = vcmp.lt.s32.totalorder %v212, 1
    %vm232 = vcmp.lt.s32.totalorder %v212, 2
    %vm233 = vcmp.lt.s32.totalorder %v212, 3
    %vm234 = vcmp.lt.s32.totalorder %v212, 4
    %v235 = vsel %vm231, %v215, %v218
    %v236 = vsel %vm234, %v224, 2102212464
    %v237 = vsel %vm233, %v221, %v236
    %v238 = vsel %vm232, %v235, %v237
    %v239 = vsel %vm231, %v218, %v221
    %v240 = vsel %vm234, %v227, 920167782
    %v241 = vsel %vm233, %v224, %v240
    %v242 = vsel %vm232, %v239, %v241
    %v243 = vsel %vm231, %v221, %v224
    %v244 = vsel %vm234, %v230, 1326507024
    %v245 = vsel %vm233, %v227, %v244
    %v246 = vsel %vm232, %v243, %v245
    %v247 = vshll.u32 %v207, 8
    %v248 = vmul.u32.u64.compose %v247, %v246
    %v249 = vextract.low.u32 %v248
    %v250 = vextract.high.u32 %v248
    %v251 = vmul.u32.u64.compose %v247, %v242
    %v252 = vextract.low.u32 %v251
    %v253 = vextract.high.u32 %v251
    %v254 = vmul.u32 %v247, %v238
    %v255 = vadd.s32 %v250, %v252
    %vm256 = vc.u32 %v250, %v252
    %v257 = vadd.s32 %v253, 1
    %v258 = vsel %vm256, %v257, %v253
    %v259 = vadd.s32 %v254, %v258
    %v260 = vadd.s32 %v259, 536870912
    %v261 = vshrl.u32 %v260, 30
    %v262 = vshll.u32 %v261, 30
    %v263 = vsub.s32 %v259, %v262
    %vm264 = vcmp.lt.s32.totalorder %v263, 0
    %v265 = vsub.s32 0, %v263
    %v266 = vsel %vm264, %v265, %v263
    %v267 = vclz %v266
    %v268 = vsub.s32 %v267, 2
    %vm269 = vcmp.gt.s32.totalorder 0, %v268
    %v270 = vsel %vm269, 0, %v268
    %v271 = vsub.s32 32, %v270
    %v272 = vshll.u32 %v263, %v270
    %v273 = vshrl.u32 %v255, %v271
    %v274 = vor.u32 %v272, %v273
    %v275 = vsub.s32 4294967266, %v270
    %v276 = vadd.s32 %v275, 127
    %v277 = vshll.u32 %v276, 23
    %v278 = vor.u32 4788187, %v277
    %v279 = vand.u32 2147483647, %v278
    %v281 = vcvt.s32.f32 %v274
    %v282 = vmul.f32 %v281, %v279
    %v283 = vxor.u32 %v282, 2147483648
    %v284 = vsel %vm201, %v283, %v282
    %v285 = vsub.s32 4, %v261
    %v286 = vsel %vm201, %v285, %v261
    %v287 = vsel %vm200, %v88, %v284
    %v288 = vsel %vm200, 0, %v286
    %v289 = vcosq.f32.pop %v287
    %v290 = vsinq.f32.pop %v287
    %vm291 = vweird.f32 %v88
    %v292 = vadd.s32 %v288, 3
    %v293 = vand.u32 %v292, 3
    %vm294 = vcmp.lt.s32.totalorder %v293, 2
    %vm295 = vcmp.eq.s32.totalorder %v293, 0
    %v296 = vxor.u32 %v290, 2147483648
    %v297 = vsel %vm295, %v289, %v296
    %vm298 = vcmp.eq.s32.totalorder %v293, 2
    %v299 = vxor.u32 %v289, 2147483648
    %v300 = vsel %vm298, %v299, %v290
    %v301 = vsel %vm294, %v297, %v300
    %v302 = vsel %vm291, nan, %v301
    %v303 = vand.u32 2147483647, %v89
    %vm304 = vcmp.le.f32.partialorder %v303, 0.7853982
    %vm305 = vcmp.lt.s32.totalorder %v89, 0
    %v306 = vand.u32 %v89, 2139095040
    %v307 = vshrl.u32 %v306, 23
    %v308 = vsub.s32 %v307, 127
    %v309 = vand.u32 2147483647, %v89
    %v310 = vand.u32 %v309, 8388607
    %v311 = vor.u32 %v310, 8388608
    %v312 = vsub.s32 0, %v311
    %v313 = vadd.s32 %v308, 1
    %vm314 = vcmp.gt.s32.totalorder %v313, 0
    %v315 = vsel %vm314, %v313, 0
    %v316 = vshrl.u32 %v315, 5
    %v317 = vand.u32 %v315, 31
    %v318 = vsub.s32 32, %v317
    %v319 = vshrl.u32 683565275, %v318
    %v320 = vshll.u32 683565275, %v317
    %v321 = vshrl.u32 2475754826, %v318
    %v322 = vor.u32 %v320, %v321
    %v323 = vshll.u32 2475754826, %v317
    %v324 = vshrl.u32 2131351028, %v318
    %v325 = vor.u32 %v323, %v324
    %v326 = vshll.u32 2131351028, %v317
    %v327 = vshrl.u32 2102212464, %v318
    %v328 = vor.u32 %v326, %v327
    %v329 = vshll.u32 2102212464, %v317
    %v330 = vshrl.u32 920167782, %v318
    %v331 = vor.u32 %v329, %v330
    %v332 = vshll.u32 920167782, %v317
    %v333 = vshrl.u32 1326507024, %v318
    %v334 = vor.u32 %v332, %v333
    %vm335 = vcmp.lt.s32.totalorder %v316, 1
    %vm336 = vcmp.lt.s32.totalorder %v316, 2
    %vm337 = vcmp.lt.s32.totalorder %v316, 3
    %vm338 = vcmp.lt.s32.totalorder %v316, 4
    %v339 = vsel %vm335, %v319, %v322
    %v340 = vsel %vm338, %v328, 2102212464
    %v341 = vsel %vm337, %v325, %v340
    %v342 = vsel %vm336, %v339, %v341
    %v343 = vsel %vm335, %v322, %v325
    %v344 = vsel %vm338, %v331, 920167782
    %v345 = vsel %vm337, %v328, %v344
    %v346 = vsel %vm336, %v343, %v345
    %v347 = vsel %vm335, %v325, %v328
    %v348 = vsel %vm338, %v334, 1326507024
    %v349 = vsel %vm337, %v331, %v348
    %v350 = vsel %vm336, %v347, %v349
    %v351 = vshll.u32 %v311, 8
    %v352 = vmul.u32.u64.compose %v351, %v350
    %v353 = vextract.low.u32 %v352
    %v354 = vextract.high.u32 %v352
    %v355 = vmul.u32.u64.compose %v351, %v346
    %v356 = vextract.low.u32 %v355
    %v357 = vextract.high.u32 %v355
    %v358 = vmul.u32 %v351, %v342
    %v359 = vadd.s32 %v354, %v356
    %vm360 = vc.u32 %v354, %v356
    %v361 = vadd.s32 %v357, 1
    %v362 = vsel %vm360, %v361, %v357
    %v363 = vadd.s32 %v358, %v362
    %v364 = vadd.s32 %v363, 536870912
    %v365 = vshrl.u32 %v364, 30
    %v366 = vshll.u32 %v365, 30
    %v367 = vsub.s32 %v363, %v366
    %vm368 = vcmp.lt.s32.totalorder %v367, 0
    %v369 = vsub.s32 0, %v367
    %v370 = vsel %vm368, %v369, %v367
    %v371 = vclz %v370
    %v372 = vsub.s32 %v371, 2
    %vm373 = vcmp.gt.s32.totalorder 0, %v372
    %v374 = vsel %vm373, 0, %v372
    %v375 = vsub.s32 32, %v374
    %v376 = vshll.u32 %v367, %v374
    %v377 = vshrl.u32 %v359, %v375
    %v378 = vor.u32 %v376, %v377
    %v379 = vsub.s32 4294967266, %v374
    %v380 = vadd.s32 %v379, 127
    %v381 = vshll.u32 %v380, 23
    %v382 = vor.u32 4788187, %v381
    %v383 = vand.u32 2147483647, %v382
    %v385 = vcvt.s32.f32 %v378
    %v386 = vmul.f32 %v385, %v383
    %v387 = vxor.u32 %v386, 2147483648
    %v388 = vsel %vm305, %v387, %v386
    %v389 = vsub.s32 4, %v365
    %v390 = vsel %vm305, %v389, %v365
    %v391 = vsel %vm304, %v89, %v388
    %v392 = vsel %vm304, 0, %v390
    %v393 = vcosq.f32.pop %v391
    %v394 = vsinq.f32.pop %v391
    %vm395 = vweird.f32 %v89
    %v396 = vadd.s32 %v392, 3
    %v397 = vand.u32 %v396, 3
    %vm398 = vcmp.lt.s32.totalorder %v397, 2
    %vm399 = vcmp.eq.s32.totalorder %v397, 0
    %v400 = vxor.u32 %v394, 2147483648
    %v401 = vsel %vm399, %v393, %v400
    %vm402 = vcmp.eq.s32.totalorder %v397, 2
    %v403 = vxor.u32 %v393, 2147483648
    %v404 = vsel %vm402, %v403, %v394
    %v405 = vsel %vm398, %v401, %v404
    %v406 = vsel %vm395, nan, %v405
    %v407 = vand.u32 2147483647, %v90
    %vm408 = vcmp.le.f32.partialorder %v407, 0.7853982
    %vm409 = vcmp.lt.s32.totalorder %v90, 0
    %v410 = vand.u32 %v90, 2139095040
    %v411 = vshrl.u32 %v410, 23
    %v412 = vsub.s32 %v411, 127
    %v413 = vand.u32 2147483647, %v90
    %v414 = vand.u32 %v413, 8388607
    %v415 = vor.u32 %v414, 8388608
    %v416 = vsub.s32 0, %v415
    %v417 = vadd.s32 %v412, 1
    %vm418 = vcmp.gt.s32.totalorder %v417, 0
    %v419 = vsel %vm418, %v417, 0
    %v420 = vshrl.u32 %v419, 5
    %v421 = vand.u32 %v419, 31
    %v422 = vsub.s32 32, %v421
    %v423 = vshrl.u32 683565275, %v422
    %v424 = vshll.u32 683565275, %v421
    %v425 = vshrl.u32 2475754826, %v422
    %v426 = vor.u32 %v424, %v425
    %v427 = vshll.u32 2475754826, %v421
    %v428 = vshrl.u32 2131351028, %v422
    %v429 = vor.u32 %v427, %v428
    %v430 = vshll.u32 2131351028, %v421
    %v431 = vshrl.u32 2102212464, %v422
    %v432 = vor.u32 %v430, %v431
    %v433 = vshll.u32 2102212464, %v421
    %v434 = vshrl.u32 920167782, %v422
    %v435 = vor.u32 %v433, %v434
    %v436 = vshll.u32 920167782, %v421
    %v437 = vshrl.u32 1326507024, %v422
    %v438 = vor.u32 %v436, %v437
    %vm439 = vcmp.lt.s32.totalorder %v420, 1
    %vm440 = vcmp.lt.s32.totalorder %v420, 2
    %vm441 = vcmp.lt.s32.totalorder %v420, 3
    %vm442 = vcmp.lt.s32.totalorder %v420, 4
    %v443 = vsel %vm439, %v423, %v426
    %v444 = vsel %vm442, %v432, 2102212464
    %v445 = vsel %vm441, %v429, %v444
    %v446 = vsel %vm440, %v443, %v445
    %v447 = vsel %vm439, %v426, %v429
    %v448 = vsel %vm442, %v435, 920167782
    %v449 = vsel %vm441, %v432, %v448
    %v450 = vsel %vm440, %v447, %v449
    %v451 = vsel %vm439, %v429, %v432
    %v452 = vsel %vm442, %v438, 1326507024
    %v453 = vsel %vm441, %v435, %v452
    %v454 = vsel %vm440, %v451, %v453
    %v455 = vshll.u32 %v415, 8
    %v456 = vmul.u32.u64.compose %v455, %v454
    %v457 = vextract.low.u32 %v456
    %v458 = vextract.high.u32 %v456
    %v459 = vmul.u32.u64.compose %v455, %v450
    %v460 = vextract.low.u32 %v459
    %v461 = vextract.high.u32 %v459
    %v462 = vmul.u32 %v455, %v446
    %v463 = vadd.s32 %v458, %v460
    %vm464 = vc.u32 %v458, %v460
    %v465 = vadd.s32 %v461, 1
    %v466 = vsel %vm464, %v465, %v461
    %v467 = vadd.s32 %v462, %v466
    %v468 = vadd.s32 %v467, 536870912
    %v469 = vshrl.u32 %v468, 30
    %v470 = vshll.u32 %v469, 30
    %v471 = vsub.s32 %v467, %v470
    %vm472 = vcmp.lt.s32.totalorder %v471, 0
    %v473 = vsub.s32 0, %v471
    %v474 = vsel %vm472, %v473, %v471
    %v475 = vclz %v474
    %v476 = vsub.s32 %v475, 2
    %vm477 = vcmp.gt.s32.totalorder 0, %v476
    %v478 = vsel %vm477, 0, %v476
    %v479 = vsub.s32 32, %v478
    %v480 = vshll.u32 %v471, %v478
    %v481 = vshrl.u32 %v463, %v479
    %v482 = vor.u32 %v480, %v481
    %v483 = vsub.s32 4294967266, %v478
    %v484 = vadd.s32 %v483, 127
    %v485 = vshll.u32 %v484, 23
    %v486 = vor.u32 4788187, %v485
    %v487 = vand.u32 2147483647, %v486
    %v489 = vcvt.s32.f32 %v482
    %v490 = vmul.f32 %v489, %v487
    %v491 = vxor.u32 %v490, 2147483648
    %v492 = vsel %vm409, %v491, %v490
    %v493 = vsub.s32 4, %v469
    %v494 = vsel %vm409, %v493, %v469
    %v495 = vsel %vm408, %v90, %v492
    %v496 = vsel %vm408, 0, %v494
    %v497 = vcosq.f32.pop %v495
    %v498 = vsinq.f32.pop %v495
    %vm499 = vweird.f32 %v90
    %v500 = vadd.s32 %v496, 3
    %v501 = vand.u32 %v500, 3
    %vm502 = vcmp.lt.s32.totalorder %v501, 2
    %vm503 = vcmp.eq.s32.totalorder %v501, 0
    %v504 = vxor.u32 %v498, 2147483648
    %v505 = vsel %vm503, %v497, %v504
    %vm506 = vcmp.eq.s32.totalorder %v501, 2
    %v507 = vxor.u32 %v497, 2147483648
    %v508 = vsel %vm506, %v507, %v498
    %v509 = vsel %vm502, %v505, %v508
    %v510 = vsel %vm499, nan, %v509
    %v511 = vand.u32 2147483647, %v91
    %vm512 = vcmp.le.f32.partialorder %v511, 0.7853982
    %vm513 = vcmp.lt.s32.totalorder %v91, 0
    %v514 = vand.u32 %v91, 2139095040
    %v515 = vshrl.u32 %v514, 23
    %v516 = vsub.s32 %v515, 127
    %v517 = vand.u32 2147483647, %v91
    %v518 = vand.u32 %v517, 8388607
    %v519 = vor.u32 %v518, 8388608
    %v520 = vsub.s32 0, %v519
    %v521 = vadd.s32 %v516, 1
    %vm522 = vcmp.gt.s32.totalorder %v521, 0
    %v523 = vsel %vm522, %v521, 0
    %v524 = vshrl.u32 %v523, 5
    %v525 = vand.u32 %v523, 31
    %v526 = vsub.s32 32, %v525
    %v527 = vshrl.u32 683565275, %v526
    %v528 = vshll.u32 683565275, %v525
    %v529 = vshrl.u32 2475754826, %v526
    %v530 = vor.u32 %v528, %v529
    %v531 = vshll.u32 2475754826, %v525
    %v532 = vshrl.u32 2131351028, %v526
    %v533 = vor.u32 %v531, %v532
    %v534 = vshll.u32 2131351028, %v525
    %v535 = vshrl.u32 2102212464, %v526
    %v536 = vor.u32 %v534, %v535
    %v537 = vshll.u32 2102212464, %v525
    %v538 = vshrl.u32 920167782, %v526
    %v539 = vor.u32 %v537, %v538
    %v540 = vshll.u32 920167782, %v525
    %v541 = vshrl.u32 1326507024, %v526
    %v542 = vor.u32 %v540, %v541
    %vm543 = vcmp.lt.s32.totalorder %v524, 1
    %vm544 = vcmp.lt.s32.totalorder %v524, 2
    %vm545 = vcmp.lt.s32.totalorder %v524, 3
    %vm546 = vcmp.lt.s32.totalorder %v524, 4
    %v547 = vsel %vm543, %v527, %v530
    %v548 = vsel %vm546, %v536, 2102212464
    %v549 = vsel %vm545, %v533, %v548
    %v550 = vsel %vm544, %v547, %v549
    %v551 = vsel %vm543, %v530, %v533
    %v552 = vsel %vm546, %v539, 920167782
    %v553 = vsel %vm545, %v536, %v552
    %v554 = vsel %vm544, %v551, %v553
    %v555 = vsel %vm543, %v533, %v536
    %v556 = vsel %vm546, %v542, 1326507024
    %v557 = vsel %vm545, %v539, %v556
    %v558 = vsel %vm544, %v555, %v557
    %v559 = vshll.u32 %v519, 8
    %v560 = vmul.u32.u64.compose %v559, %v558
    %v561 = vextract.low.u32 %v560
    %v562 = vextract.high.u32 %v560
    %v563 = vmul.u32.u64.compose %v559, %v554
    %v564 = vextract.low.u32 %v563
    %v565 = vextract.high.u32 %v563
    %v566 = vmul.u32 %v559, %v550
    %v567 = vadd.s32 %v562, %v564
    %vm568 = vc.u32 %v562, %v564
    %v569 = vadd.s32 %v565, 1
    %v570 = vsel %vm568, %v569, %v565
    %v571 = vadd.s32 %v566, %v570
    %v572 = vadd.s32 %v571, 536870912
    %v573 = vshrl.u32 %v572, 30
    %v574 = vshll.u32 %v573, 30
    %v575 = vsub.s32 %v571, %v574
    %vm576 = vcmp.lt.s32.totalorder %v575, 0
    %v577 = vsub.s32 0, %v575
    %v578 = vsel %vm576, %v577, %v575
    %v579 = vclz %v578
    %v580 = vsub.s32 %v579, 2
    %vm581 = vcmp.gt.s32.totalorder 0, %v580
    %v582 = vsel %vm581, 0, %v580
    %v583 = vsub.s32 32, %v582
    %v584 = vshll.u32 %v575, %v582
    %v585 = vshrl.u32 %v567, %v583
    %v586 = vor.u32 %v584, %v585
    %v587 = vsub.s32 4294967266, %v582
    %v588 = vadd.s32 %v587, 127
    %v589 = vshll.u32 %v588, 23
    %v590 = vor.u32 4788187, %v589
    %v591 = vand.u32 2147483647, %v590
    %v593 = vcvt.s32.f32 %v586
    %v594 = vmul.f32 %v593, %v591
    %v595 = vxor.u32 %v594, 2147483648
    %v596 = vsel %vm513, %v595, %v594
    %v597 = vsub.s32 4, %v573
    %v598 = vsel %vm513, %v597, %v573
    %v599 = vsel %vm512, %v91, %v596
    %v600 = vsel %vm512, 0, %v598
    %v601 = vcosq.f32.pop %v599
    %v602 = vsinq.f32.pop %v599
    %vm603 = vweird.f32 %v91
    %v604 = vadd.s32 %v600, 3
    %v605 = vand.u32 %v604, 3
    %vm606 = vcmp.lt.s32.totalorder %v605, 2
    %vm607 = vcmp.eq.s32.totalorder %v605, 0
    %v608 = vxor.u32 %v602, 2147483648
    %v609 = vsel %vm607, %v601, %v608
    %vm610 = vcmp.eq.s32.totalorder %v605, 2
    %v611 = vxor.u32 %v601, 2147483648
    %v612 = vsel %vm610, %v611, %v602
    %v613 = vsel %vm606, %v609, %v612
    %v614 = vsel %vm603, nan, %v613
    %v615 = vand.u32 2147483647, %v92
    %vm616 = vcmp.le.f32.partialorder %v615, 0.7853982
    %vm617 = vcmp.lt.s32.totalorder %v92, 0
    %v618 = vand.u32 %v92, 2139095040
    %v619 = vshrl.u32 %v618, 23
    %v620 = vsub.s32 %v619, 127
    %v621 = vand.u32 2147483647, %v92
    %v622 = vand.u32 %v621, 8388607
    %v623 = vor.u32 %v622, 8388608
    %v624 = vsub.s32 0, %v623
    %v625 = vadd.s32 %v620, 1
    %vm626 = vcmp.gt.s32.totalorder %v625, 0
    %v627 = vsel %vm626, %v625, 0
    %v628 = vshrl.u32 %v627, 5
    %v629 = vand.u32 %v627, 31
    %v630 = vsub.s32 32, %v629
    %v631 = vshrl.u32 683565275, %v630
    %v632 = vshll.u32 683565275, %v629
    %v633 = vshrl.u32 2475754826, %v630
    %v634 = vor.u32 %v632, %v633
    %v635 = vshll.u32 2475754826, %v629
    %v636 = vshrl.u32 2131351028, %v630
    %v637 = vor.u32 %v635, %v636
    %v638 = vshll.u32 2131351028, %v629
    %v639 = vshrl.u32 2102212464, %v630
    %v640 = vor.u32 %v638, %v639
    %v641 = vshll.u32 2102212464, %v629
    %v642 = vshrl.u32 920167782, %v630
    %v643 = vor.u32 %v641, %v642
    %v644 = vshll.u32 920167782, %v629
    %v645 = vshrl.u32 1326507024, %v630
    %v646 = vor.u32 %v644, %v645
    %vm647 = vcmp.lt.s32.totalorder %v628, 1
    %vm648 = vcmp.lt.s32.totalorder %v628, 2
    %vm649 = vcmp.lt.s32.totalorder %v628, 3
    %vm650 = vcmp.lt.s32.totalorder %v628, 4
    %v651 = vsel %vm647, %v631, %v634
    %v652 = vsel %vm650, %v640, 2102212464
    %v653 = vsel %vm649, %v637, %v652
    %v654 = vsel %vm648, %v651, %v653
    %v655 = vsel %vm647, %v634, %v637
    %v656 = vsel %vm650, %v643, 920167782
    %v657 = vsel %vm649, %v640, %v656
    %v658 = vsel %vm648, %v655, %v657
    %v659 = vsel %vm647, %v637, %v640
    %v660 = vsel %vm650, %v646, 1326507024
    %v661 = vsel %vm649, %v643, %v660
    %v662 = vsel %vm648, %v659, %v661
    %v663 = vshll.u32 %v623, 8
    %v664 = vmul.u32.u64.compose %v663, %v662
    %v665 = vextract.low.u32 %v664
    %v666 = vextract.high.u32 %v664
    %v667 = vmul.u32.u64.compose %v663, %v658
    %v668 = vextract.low.u32 %v667
    %v669 = vextract.high.u32 %v667
    %v670 = vmul.u32 %v663, %v654
    %v671 = vadd.s32 %v666, %v668
    %vm672 = vc.u32 %v666, %v668
    %v673 = vadd.s32 %v669, 1
    %v674 = vsel %vm672, %v673, %v669
    %v675 = vadd.s32 %v670, %v674
    %v676 = vadd.s32 %v675, 536870912
    %v677 = vshrl.u32 %v676, 30
    %v678 = vshll.u32 %v677, 30
    %v679 = vsub.s32 %v675, %v678
    %vm680 = vcmp.lt.s32.totalorder %v679, 0
    %v681 = vsub.s32 0, %v679
    %v682 = vsel %vm680, %v681, %v679
    %v683 = vclz %v682
    %v684 = vsub.s32 %v683, 2
    %vm685 = vcmp.gt.s32.totalorder 0, %v684
    %v686 = vsel %vm685, 0, %v684
    %v687 = vsub.s32 32, %v686
    %v688 = vshll.u32 %v679, %v686
    %v689 = vshrl.u32 %v671, %v687
    %v690 = vor.u32 %v688, %v689
    %v691 = vsub.s32 4294967266, %v686
    %v692 = vadd.s32 %v691, 127
    %v693 = vshll.u32 %v692, 23
    %v694 = vor.u32 4788187, %v693
    %v695 = vand.u32 2147483647, %v694
    %v697 = vcvt.s32.f32 %v690
    %v698 = vmul.f32 %v697, %v695
    %v699 = vxor.u32 %v698, 2147483648
    %v700 = vsel %vm617, %v699, %v698
    %v701 = vsub.s32 4, %v677
    %v702 = vsel %vm617, %v701, %v677
    %v703 = vsel %vm616, %v92, %v700
    %v704 = vsel %vm616, 0, %v702
    %v705 = vcosq.f32.pop %v703
    %v706 = vsinq.f32.pop %v703
    %vm707 = vweird.f32 %v92
    %v708 = vadd.s32 %v704, 3
    %v709 = vand.u32 %v708, 3
    %vm710 = vcmp.lt.s32.totalorder %v709, 2
    %vm711 = vcmp.eq.s32.totalorder %v709, 0
    %v712 = vxor.u32 %v706, 2147483648
    %v713 = vsel %vm711, %v705, %v712
    %vm714 = vcmp.eq.s32.totalorder %v709, 2
    %v715 = vxor.u32 %v705, 2147483648
    %v716 = vsel %vm714, %v715, %v706
    %v717 = vsel %vm710, %v713, %v716
    %v718 = vsel %vm707, nan, %v717
    %v719 = vand.u32 2147483647, %v93
    %vm720 = vcmp.le.f32.partialorder %v719, 0.7853982
    %vm721 = vcmp.lt.s32.totalorder %v93, 0
    %v722 = vand.u32 %v93, 2139095040
    %v723 = vshrl.u32 %v722, 23
    %v724 = vsub.s32 %v723, 127
    %v725 = vand.u32 2147483647, %v93
    %v726 = vand.u32 %v725, 8388607
    %v727 = vor.u32 %v726, 8388608
    %v728 = vsub.s32 0, %v727
    %v729 = vadd.s32 %v724, 1
    %vm730 = vcmp.gt.s32.totalorder %v729, 0
    %v731 = vsel %vm730, %v729, 0
    %v732 = vshrl.u32 %v731, 5
    %v733 = vand.u32 %v731, 31
    %v734 = vsub.s32 32, %v733
    %v735 = vshrl.u32 683565275, %v734
    %v736 = vshll.u32 683565275, %v733
    %v737 = vshrl.u32 2475754826, %v734
    %v738 = vor.u32 %v736, %v737
    %v739 = vshll.u32 2475754826, %v733
    %v740 = vshrl.u32 2131351028, %v734
    %v741 = vor.u32 %v739, %v740
    %v742 = vshll.u32 2131351028, %v733
    %v743 = vshrl.u32 2102212464, %v734
    %v744 = vor.u32 %v742, %v743
    %v745 = vshll.u32 2102212464, %v733
    %v746 = vshrl.u32 920167782, %v734
    %v747 = vor.u32 %v745, %v746
    %v748 = vshll.u32 920167782, %v733
    %v749 = vshrl.u32 1326507024, %v734
    %v750 = vor.u32 %v748, %v749
    %vm751 = vcmp.lt.s32.totalorder %v732, 1
    %vm752 = vcmp.lt.s32.totalorder %v732, 2
    %vm753 = vcmp.lt.s32.totalorder %v732, 3
    %vm754 = vcmp.lt.s32.totalorder %v732, 4
    %v755 = vsel %vm751, %v735, %v738
    %v756 = vsel %vm754, %v744, 2102212464
    %v757 = vsel %vm753, %v741, %v756
    %v758 = vsel %vm752, %v755, %v757
    %v759 = vsel %vm751, %v738, %v741
    %v760 = vsel %vm754, %v747, 920167782
    %v761 = vsel %vm753, %v744, %v760
    %v762 = vsel %vm752, %v759, %v761
    %v763 = vsel %vm751, %v741, %v744
    %v764 = vsel %vm754, %v750, 1326507024
    %v765 = vsel %vm753, %v747, %v764
    %v766 = vsel %vm752, %v763, %v765
    %v767 = vshll.u32 %v727, 8
    %v768 = vmul.u32.u64.compose %v767, %v766
    %v769 = vextract.low.u32 %v768
    %v770 = vextract.high.u32 %v768
    %v771 = vmul.u32.u64.compose %v767, %v762
    %v772 = vextract.low.u32 %v771
    %v773 = vextract.high.u32 %v771
    %v774 = vmul.u32 %v767, %v758
    %v775 = vadd.s32 %v770, %v772
    %vm776 = vc.u32 %v770, %v772
    %v777 = vadd.s32 %v773, 1
    %v778 = vsel %vm776, %v777, %v773
    %v779 = vadd.s32 %v774, %v778
    %v780 = vadd.s32 %v779, 536870912
    %v781 = vshrl.u32 %v780, 30
    %v782 = vshll.u32 %v781, 30
    %v783 = vsub.s32 %v779, %v782
    %vm784 = vcmp.lt.s32.totalorder %v783, 0
    %v785 = vsub.s32 0, %v783
    %v786 = vsel %vm784, %v785, %v783
    %v787 = vclz %v786
    %v788 = vsub.s32 %v787, 2
    %vm789 = vcmp.gt.s32.totalorder 0, %v788
    %v790 = vsel %vm789, 0, %v788
    %v791 = vsub.s32 32, %v790
    %v792 = vshll.u32 %v783, %v790
    %v793 = vshrl.u32 %v775, %v791
    %v794 = vor.u32 %v792, %v793
    %v795 = vsub.s32 4294967266, %v790
    %v796 = vadd.s32 %v795, 127
    %v797 = vshll.u32 %v796, 23
    %v798 = vor.u32 4788187, %v797
    %v799 = vand.u32 2147483647, %v798
    %v801 = vcvt.s32.f32 %v794
    %v802 = vmul.f32 %v801, %v799
    %v803 = vxor.u32 %v802, 2147483648
    %v804 = vsel %vm721, %v803, %v802
    %v805 = vsub.s32 4, %v781
    %v806 = vsel %vm721, %v805, %v781
    %v807 = vsel %vm720, %v93, %v804
    %v808 = vsel %vm720, 0, %v806
    %v809 = vcosq.f32.pop %v807
    %v810 = vsinq.f32.pop %v807
    %vm811 = vweird.f32 %v93
    %v812 = vadd.s32 %v808, 3
    %v813 = vand.u32 %v812, 3
    %vm814 = vcmp.lt.s32.totalorder %v813, 2
    %vm815 = vcmp.eq.s32.totalorder %v813, 0
    %v816 = vxor.u32 %v810, 2147483648
    %v817 = vsel %vm815, %v809, %v816
    %vm818 = vcmp.eq.s32.totalorder %v813, 2
    %v819 = vxor.u32 %v809, 2147483648
    %v820 = vsel %vm818, %v819, %v810
    %v821 = vsel %vm814, %v817, %v820
    %v822 = vsel %vm811, nan, %v821
    %v823 = vand.u32 2147483647, %v94
    %vm824 = vcmp.le.f32.partialorder %v823, 0.7853982
    %vm825 = vcmp.lt.s32.totalorder %v94, 0
    %v826 = vand.u32 %v94, 2139095040
    %v827 = vshrl.u32 %v826, 23
    %v828 = vsub.s32 %v827, 127
    %v829 = vand.u32 2147483647, %v94
    %v830 = vand.u32 %v829, 8388607
    %v831 = vor.u32 %v830, 8388608
    %v832 = vsub.s32 0, %v831
    %v833 = vadd.s32 %v828, 1
    %vm834 = vcmp.gt.s32.totalorder %v833, 0
    %v835 = vsel %vm834, %v833, 0
    %v836 = vshrl.u32 %v835, 5
    %v837 = vand.u32 %v835, 31
    %v838 = vsub.s32 32, %v837
    %v839 = vshrl.u32 683565275, %v838
    %v840 = vshll.u32 683565275, %v837
    %v841 = vshrl.u32 2475754826, %v838
    %v842 = vor.u32 %v840, %v841
    %v843 = vshll.u32 2475754826, %v837
    %v844 = vshrl.u32 2131351028, %v838
    %v845 = vor.u32 %v843, %v844
    %v846 = vshll.u32 2131351028, %v837
    %v847 = vshrl.u32 2102212464, %v838
    %v848 = vor.u32 %v846, %v847
    %v849 = vshll.u32 2102212464, %v837
    %v850 = vshrl.u32 920167782, %v838
    %v851 = vor.u32 %v849, %v850
    %v852 = vshll.u32 920167782, %v837
    %v853 = vshrl.u32 1326507024, %v838
    %v854 = vor.u32 %v852, %v853
    %vm855 = vcmp.lt.s32.totalorder %v836, 1
    %vm856 = vcmp.lt.s32.totalorder %v836, 2
    %vm857 = vcmp.lt.s32.totalorder %v836, 3
    %vm858 = vcmp.lt.s32.totalorder %v836, 4
    %v859 = vsel %vm855, %v839, %v842
    %v860 = vsel %vm858, %v848, 2102212464
    %v861 = vsel %vm857, %v845, %v860
    %v862 = vsel %vm856, %v859, %v861
    %v863 = vsel %vm855, %v842, %v845
    %v864 = vsel %vm858, %v851, 920167782
    %v865 = vsel %vm857, %v848, %v864
    %v866 = vsel %vm856, %v863, %v865
    %v867 = vsel %vm855, %v845, %v848
    %v868 = vsel %vm858, %v854, 1326507024
    %v869 = vsel %vm857, %v851, %v868
    %v870 = vsel %vm856, %v867, %v869
    %v871 = vshll.u32 %v831, 8
    %v872 = vmul.u32.u64.compose %v871, %v870
    %v873 = vextract.low.u32 %v872
    %v874 = vextract.high.u32 %v872
    %v875 = vmul.u32.u64.compose %v871, %v866
    %v876 = vextract.low.u32 %v875
    %v877 = vextract.high.u32 %v875
    %v878 = vmul.u32 %v871, %v862
    %v879 = vadd.s32 %v874, %v876
    %vm880 = vc.u32 %v874, %v876
    %v881 = vadd.s32 %v877, 1
    %v882 = vsel %vm880, %v881, %v877
    %v883 = vadd.s32 %v878, %v882
    %v884 = vadd.s32 %v883, 536870912
    %v885 = vshrl.u32 %v884, 30
    %v886 = vshll.u32 %v885, 30
    %v887 = vsub.s32 %v883, %v886
    %vm888 = vcmp.lt.s32.totalorder %v887, 0
    %v889 = vsub.s32 0, %v887
    %v890 = vsel %vm888, %v889, %v887
    %v891 = vclz %v890
    %v892 = vsub.s32 %v891, 2
    %vm893 = vcmp.gt.s32.totalorder 0, %v892
    %v894 = vsel %vm893, 0, %v892
    %v895 = vsub.s32 32, %v894
    %v896 = vshll.u32 %v887, %v894
    %v897 = vshrl.u32 %v879, %v895
    %v898 = vor.u32 %v896, %v897
    %v899 = vsub.s32 4294967266, %v894
    %v900 = vadd.s32 %v899, 127
    %v901 = vshll.u32 %v900, 23
    %v902 = vor.u32 4788187, %v901
    %v903 = vand.u32 2147483647, %v902
    %v905 = vcvt.s32.f32 %v898
    %v906 = vmul.f32 %v905, %v903
    %v907 = vxor.u32 %v906, 2147483648
    %v908 = vsel %vm825, %v907, %v906
    %v909 = vsub.s32 4, %v885
    %v910 = vsel %vm825, %v909, %v885
    %v911 = vsel %vm824, %v94, %v908
    %v912 = vsel %vm824, 0, %v910
    %v913 = vcosq.f32.pop %v911
    %v914 = vsinq.f32.pop %v911
    %vm915 = vweird.f32 %v94
    %v916 = vadd.s32 %v912, 3
    %v917 = vand.u32 %v916, 3
    %vm918 = vcmp.lt.s32.totalorder %v917, 2
    %vm919 = vcmp.eq.s32.totalorder %v917, 0
    %v920 = vxor.u32 %v914, 2147483648
    %v921 = vsel %vm919, %v913, %v920
    %vm922 = vcmp.eq.s32.totalorder %v917, 2
    %v923 = vxor.u32 %v913, 2147483648
    %v924 = vsel %vm922, %v923, %v914
    %v925 = vsel %vm918, %v921, %v924
    %v926 = vsel %vm915, nan, %v925
    %v927 = vand.u32 2147483647, %v87
    %vm928 = vcmp.le.f32.partialorder %v927, 0.7853982
    %vm929 = vcmp.lt.s32.totalorder %v87, 0
    %v930 = vand.u32 %v87, 2139095040
    %v931 = vshrl.u32 %v930, 23
    %v932 = vsub.s32 %v931, 127
    %v933 = vand.u32 2147483647, %v87
    %v934 = vand.u32 %v933, 8388607
    %v935 = vor.u32 %v934, 8388608
    %v936 = vsub.s32 0, %v935
    %v937 = vadd.s32 %v932, 1
    %vm938 = vcmp.gt.s32.totalorder %v937, 0
    %v939 = vsel %vm938, %v937, 0
    %v940 = vshrl.u32 %v939, 5
    %v941 = vand.u32 %v939, 31
    %v942 = vsub.s32 32, %v941
    %v943 = vshrl.u32 683565275, %v942
    %v944 = vshll.u32 683565275, %v941
    %v945 = vshrl.u32 2475754826, %v942
    %v946 = vor.u32 %v944, %v945
    %v947 = vshll.u32 2475754826, %v941
    %v948 = vshrl.u32 2131351028, %v942
    %v949 = vor.u32 %v947, %v948
    %v950 = vshll.u32 2131351028, %v941
    %v951 = vshrl.u32 2102212464, %v942
    %v952 = vor.u32 %v950, %v951
    %v953 = vshll.u32 2102212464, %v941
    %v954 = vshrl.u32 920167782, %v942
    %v955 = vor.u32 %v953, %v954
    %v956 = vshll.u32 920167782, %v941
    %v957 = vshrl.u32 1326507024, %v942
    %v958 = vor.u32 %v956, %v957
    %vm959 = vcmp.lt.s32.totalorder %v940, 1
    %vm960 = vcmp.lt.s32.totalorder %v940, 2
    %vm961 = vcmp.lt.s32.totalorder %v940, 3
    %vm962 = vcmp.lt.s32.totalorder %v940, 4
    %v963 = vsel %vm959, %v943, %v946
    %v964 = vsel %vm962, %v952, 2102212464
    %v965 = vsel %vm961, %v949, %v964
    %v966 = vsel %vm960, %v963, %v965
    %v967 = vsel %vm959, %v946, %v949
    %v968 = vsel %vm962, %v955, 920167782
    %v969 = vsel %vm961, %v952, %v968
    %v970 = vsel %vm960, %v967, %v969
    %v971 = vsel %vm959, %v949, %v952
    %v972 = vsel %vm962, %v958, 1326507024
    %v973 = vsel %vm961, %v955, %v972
    %v974 = vsel %vm960, %v971, %v973
    %v975 = vshll.u32 %v935, 8
    %v976 = vmul.u32.u64.compose %v975, %v974
    %v977 = vextract.low.u32 %v976
    %v978 = vextract.high.u32 %v976
    %v979 = vmul.u32.u64.compose %v975, %v970
    %v980 = vextract.low.u32 %v979
    %v981 = vextract.high.u32 %v979
    %v982 = vmul.u32 %v975, %v966
    %v983 = vadd.s32 %v978, %v980
    %vm984 = vc.u32 %v978, %v980
    %v985 = vadd.s32 %v981, 1
    %v986 = vsel %vm984, %v985, %v981
    %v987 = vadd.s32 %v982, %v986
    %v988 = vadd.s32 %v987, 536870912
    %v989 = vshrl.u32 %v988, 30
    %v990 = vshll.u32 %v989, 30
    %v991 = vsub.s32 %v987, %v990
    %vm992 = vcmp.lt.s32.totalorder %v991, 0
    %v993 = vsub.s32 0, %v991
    %v994 = vsel %vm992, %v993, %v991
    %v995 = vclz %v994
    %v996 = vsub.s32 %v995, 2
    %vm997 = vcmp.gt.s32.totalorder 0, %v996
    %v998 = vsel %vm997, 0, %v996
    %v999 = vsub.s32 32, %v998
    %v1000 = vshll.u32 %v991, %v998
    %v1001 = vshrl.u32 %v983, %v999
    %v1002 = vor.u32 %v1000, %v1001
    %v1003 = vsub.s32 4294967266, %v998
    %v1004 = vadd.s32 %v1003, 127
    %v1005 = vshll.u32 %v1004, 23
    %v1006 = vor.u32 4788187, %v1005
    %v1007 = vand.u32 2147483647, %v1006
    %v1009 = vcvt.s32.f32 %v1002
    %v1010 = vmul.f32 %v1009, %v1007
    %v1011 = vxor.u32 %v1010, 2147483648
    %v1012 = vsel %vm929, %v1011, %v1010
    %v1013 = vsub.s32 4, %v989
    %v1014 = vsel %vm929, %v1013, %v989
    %v1015 = vsel %vm928, %v87, %v1012
    %v1016 = vsel %vm928, 0, %v1014
    %v1017 = vcosq.f32.pop %v1015
    %v1018 = vsinq.f32.pop %v1015
    %vm1019 = vweird.f32 %v87
    %v1020 = vand.u32 %v1016, 3
    %vm1021 = vcmp.lt.s32.totalorder %v1020, 2
    %vm1022 = vcmp.eq.s32.totalorder %v1020, 0
    %v1023 = vxor.u32 %v1018, 2147483648
    %v1024 = vsel %vm1022, %v1017, %v1023
    %vm1025 = vcmp.eq.s32.totalorder %v1020, 2
    %v1026 = vxor.u32 %v1017, 2147483648
    %v1027 = vsel %vm1025, %v1026, %v1018
    %v1028 = vsel %vm1021, %v1024, %v1027
    %v1029 = vsel %vm1019, nan, %v1028
    %v1030 = vand.u32 2147483647, %v88
    %vm1031 = vcmp.le.f32.partialorder %v1030, 0.7853982
    %vm1032 = vcmp.lt.s32.totalorder %v88, 0
    %v1033 = vand.u32 %v88, 2139095040
    %v1034 = vshrl.u32 %v1033, 23
    %v1035 = vsub.s32 %v1034, 127
    %v1036 = vand.u32 2147483647, %v88
    %v1037 = vand.u32 %v1036, 8388607
    %v1038 = vor.u32 %v1037, 8388608
    %v1039 = vsub.s32 0, %v1038
    %v1040 = vadd.s32 %v1035, 1
    %vm1041 = vcmp.gt.s32.totalorder %v1040, 0
    %v1042 = vsel %vm1041, %v1040, 0
    %v1043 = vshrl.u32 %v1042, 5
    %v1044 = vand.u32 %v1042, 31
    %v1045 = vsub.s32 32, %v1044
    %v1046 = vshrl.u32 683565275, %v1045
    %v1047 = vshll.u32 683565275, %v1044
    %v1048 = vshrl.u32 2475754826, %v1045
    %v1049 = vor.u32 %v1047, %v1048
    %v1050 = vshll.u32 2475754826, %v1044
    %v1051 = vshrl.u32 2131351028, %v1045
    %v1052 = vor.u32 %v1050, %v1051
    %v1053 = vshll.u32 2131351028, %v1044
    %v1054 = vshrl.u32 2102212464, %v1045
    %v1055 = vor.u32 %v1053, %v1054
    %v1056 = vshll.u32 2102212464, %v1044
    %v1057 = vshrl.u32 920167782, %v1045
    %v1058 = vor.u32 %v1056, %v1057
    %v1059 = vshll.u32 920167782, %v1044
    %v1060 = vshrl.u32 1326507024, %v1045
    %v1061 = vor.u32 %v1059, %v1060
    %vm1062 = vcmp.lt.s32.totalorder %v1043, 1
    %vm1063 = vcmp.lt.s32.totalorder %v1043, 2
    %vm1064 = vcmp.lt.s32.totalorder %v1043, 3
    %vm1065 = vcmp.lt.s32.totalorder %v1043, 4
    %v1066 = vsel %vm1062, %v1046, %v1049
    %v1067 = vsel %vm1065, %v1055, 2102212464
    %v1068 = vsel %vm1064, %v1052, %v1067
    %v1069 = vsel %vm1063, %v1066, %v1068
    %v1070 = vsel %vm1062, %v1049, %v1052
    %v1071 = vsel %vm1065, %v1058, 920167782
    %v1072 = vsel %vm1064, %v1055, %v1071
    %v1073 = vsel %vm1063, %v1070, %v1072
    %v1074 = vsel %vm1062, %v1052, %v1055
    %v1075 = vsel %vm1065, %v1061, 1326507024
    %v1076 = vsel %vm1064, %v1058, %v1075
    %v1077 = vsel %vm1063, %v1074, %v1076
    %v1078 = vshll.u32 %v1038, 8
    %v1079 = vmul.u32.u64.compose %v1078, %v1077
    %v1080 = vextract.low.u32 %v1079
    %v1081 = vextract.high.u32 %v1079
    %v1082 = vmul.u32.u64.compose %v1078, %v1073
    %v1083 = vextract.low.u32 %v1082
    %v1084 = vextract.high.u32 %v1082
    %v1085 = vmul.u32 %v1078, %v1069
    %v1086 = vadd.s32 %v1081, %v1083
    %vm1087 = vc.u32 %v1081, %v1083
    %v1088 = vadd.s32 %v1084, 1
    %v1089 = vsel %vm1087, %v1088, %v1084
    %v1090 = vadd.s32 %v1085, %v1089
    %v1091 = vadd.s32 %v1090, 536870912
    %v1092 = vshrl.u32 %v1091, 30
    %v1093 = vshll.u32 %v1092, 30
    %v1094 = vsub.s32 %v1090, %v1093
    %vm1095 = vcmp.lt.s32.totalorder %v1094, 0
    %v1096 = vsub.s32 0, %v1094
    %v1097 = vsel %vm1095, %v1096, %v1094
    %v1098 = vclz %v1097
    %v1099 = vsub.s32 %v1098, 2
    %vm1100 = vcmp.gt.s32.totalorder 0, %v1099
    %v1101 = vsel %vm1100, 0, %v1099
    %v1102 = vsub.s32 32, %v1101
    %v1103 = vshll.u32 %v1094, %v1101
    %v1104 = vshrl.u32 %v1086, %v1102
    %v1105 = vor.u32 %v1103, %v1104
    %v1106 = vsub.s32 4294967266, %v1101
    %v1107 = vadd.s32 %v1106, 127
    %v1108 = vshll.u32 %v1107, 23
    %v1109 = vor.u32 4788187, %v1108
    %v1110 = vand.u32 2147483647, %v1109
    %v1112 = vcvt.s32.f32 %v1105
    %v1113 = vmul.f32 %v1112, %v1110
    %v1114 = vxor.u32 %v1113, 2147483648
    %v1115 = vsel %vm1032, %v1114, %v1113
    %v1116 = vsub.s32 4, %v1092
    %v1117 = vsel %vm1032, %v1116, %v1092
    %v1118 = vsel %vm1031, %v88, %v1115
    %v1119 = vsel %vm1031, 0, %v1117
    %v1120 = vcosq.f32.pop %v1118
    %v1121 = vsinq.f32.pop %v1118
    %vm1122 = vweird.f32 %v88
    %v1123 = vand.u32 %v1119, 3
    %vm1124 = vcmp.lt.s32.totalorder %v1123, 2
    %vm1125 = vcmp.eq.s32.totalorder %v1123, 0
    %v1126 = vxor.u32 %v1121, 2147483648
    %v1127 = vsel %vm1125, %v1120, %v1126
    %vm1128 = vcmp.eq.s32.totalorder %v1123, 2
    %v1129 = vxor.u32 %v1120, 2147483648
    %v1130 = vsel %vm1128, %v1129, %v1121
    %v1131 = vsel %vm1124, %v1127, %v1130
    %v1132 = vsel %vm1122, nan, %v1131
    %v1133 = vand.u32 2147483647, %v89
    %vm1134 = vcmp.le.f32.partialorder %v1133, 0.7853982
    %vm1135 = vcmp.lt.s32.totalorder %v89, 0
    %v1136 = vand.u32 %v89, 2139095040
    %v1137 = vshrl.u32 %v1136, 23
    %v1138 = vsub.s32 %v1137, 127
    %v1139 = vand.u32 2147483647, %v89
    %v1140 = vand.u32 %v1139, 8388607
    %v1141 = vor.u32 %v1140, 8388608
    %v1142 = vsub.s32 0, %v1141
    %v1143 = vadd.s32 %v1138, 1
    %vm1144 = vcmp.gt.s32.totalorder %v1143, 0
    %v1145 = vsel %vm1144, %v1143, 0
    %v1146 = vshrl.u32 %v1145, 5
    %v1147 = vand.u32 %v1145, 31
    %v1148 = vsub.s32 32, %v1147
    %v1149 = vshrl.u32 683565275, %v1148
    %v1150 = vshll.u32 683565275, %v1147
    %v1151 = vshrl.u32 2475754826, %v1148
    %v1152 = vor.u32 %v1150, %v1151
    %v1153 = vshll.u32 2475754826, %v1147
    %v1154 = vshrl.u32 2131351028, %v1148
    %v1155 = vor.u32 %v1153, %v1154
    %v1156 = vshll.u32 2131351028, %v1147
    %v1157 = vshrl.u32 2102212464, %v1148
    %v1158 = vor.u32 %v1156, %v1157
    %v1159 = vshll.u32 2102212464, %v1147
    %v1160 = vshrl.u32 920167782, %v1148
    %v1161 = vor.u32 %v1159, %v1160
    %v1162 = vshll.u32 920167782, %v1147
    %v1163 = vshrl.u32 1326507024, %v1148
    %v1164 = vor.u32 %v1162, %v1163
    %vm1165 = vcmp.lt.s32.totalorder %v1146, 1
    %vm1166 = vcmp.lt.s32.totalorder %v1146, 2
    %vm1167 = vcmp.lt.s32.totalorder %v1146, 3
    %vm1168 = vcmp.lt.s32.totalorder %v1146, 4
    %v1169 = vsel %vm1165, %v1149, %v1152
    %v1170 = vsel %vm1168, %v1158, 2102212464
    %v1171 = vsel %vm1167, %v1155, %v1170
    %v1172 = vsel %vm1166, %v1169, %v1171
    %v1173 = vsel %vm1165, %v1152, %v1155
    %v1174 = vsel %vm1168, %v1161, 920167782
    %v1175 = vsel %vm1167, %v1158, %v1174
    %v1176 = vsel %vm1166, %v1173, %v1175
    %v1177 = vsel %vm1165, %v1155, %v1158
    %v1178 = vsel %vm1168, %v1164, 1326507024
    %v1179 = vsel %vm1167, %v1161, %v1178
    %v1180 = vsel %vm1166, %v1177, %v1179
    %v1181 = vshll.u32 %v1141, 8
    %v1182 = vmul.u32.u64.compose %v1181, %v1180
    %v1183 = vextract.low.u32 %v1182
    %v1184 = vextract.high.u32 %v1182
    %v1185 = vmul.u32.u64.compose %v1181, %v1176
    %v1186 = vextract.low.u32 %v1185
    %v1187 = vextract.high.u32 %v1185
    %v1188 = vmul.u32 %v1181, %v1172
    %v1189 = vadd.s32 %v1184, %v1186
    %vm1190 = vc.u32 %v1184, %v1186
    %v1191 = vadd.s32 %v1187, 1
    %v1192 = vsel %vm1190, %v1191, %v1187
    %v1193 = vadd.s32 %v1188, %v1192
    %v1194 = vadd.s32 %v1193, 536870912
    %v1195 = vshrl.u32 %v1194, 30
    %v1196 = vshll.u32 %v1195, 30
    %v1197 = vsub.s32 %v1193, %v1196
    %vm1198 = vcmp.lt.s32.totalorder %v1197, 0
    %v1199 = vsub.s32 0, %v1197
    %v1200 = vsel %vm1198, %v1199, %v1197
    %v1201 = vclz %v1200
    %v1202 = vsub.s32 %v1201, 2
    %vm1203 = vcmp.gt.s32.totalorder 0, %v1202
    %v1204 = vsel %vm1203, 0, %v1202
    %v1205 = vsub.s32 32, %v1204
    %v1206 = vshll.u32 %v1197, %v1204
    %v1207 = vshrl.u32 %v1189, %v1205
    %v1208 = vor.u32 %v1206, %v1207
    %v1209 = vsub.s32 4294967266, %v1204
    %v1210 = vadd.s32 %v1209, 127
    %v1211 = vshll.u32 %v1210, 23
    %v1212 = vor.u32 4788187, %v1211
    %v1213 = vand.u32 2147483647, %v1212
    %v1215 = vcvt.s32.f32 %v1208
    %v1216 = vmul.f32 %v1215, %v1213
    %v1217 = vxor.u32 %v1216, 2147483648
    %v1218 = vsel %vm1135, %v1217, %v1216
    %v1219 = vsub.s32 4, %v1195
    %v1220 = vsel %vm1135, %v1219, %v1195
    %v1221 = vsel %vm1134, %v89, %v1218
    %v1222 = vsel %vm1134, 0, %v1220
    %v1223 = vcosq.f32.pop %v1221
    %v1224 = vsinq.f32.pop %v1221
    %vm1225 = vweird.f32 %v89
    %v1226 = vand.u32 %v1222, 3
    %vm1227 = vcmp.lt.s32.totalorder %v1226, 2
    %vm1228 = vcmp.eq.s32.totalorder %v1226, 0
    %v1229 = vxor.u32 %v1224, 2147483648
    %v1230 = vsel %vm1228, %v1223, %v1229
    %vm1231 = vcmp.eq.s32.totalorder %v1226, 2
    %v1232 = vxor.u32 %v1223, 2147483648
    %v1233 = vsel %vm1231, %v1232, %v1224
    %v1234 = vsel %vm1227, %v1230, %v1233
    %v1235 = vsel %vm1225, nan, %v1234
    %v1236 = vand.u32 2147483647, %v90
    %vm1237 = vcmp.le.f32.partialorder %v1236, 0.7853982
    %vm1238 = vcmp.lt.s32.totalorder %v90, 0
    %v1239 = vand.u32 %v90, 2139095040
    %v1240 = vshrl.u32 %v1239, 23
    %v1241 = vsub.s32 %v1240, 127
    %v1242 = vand.u32 2147483647, %v90
    %v1243 = vand.u32 %v1242, 8388607
    %v1244 = vor.u32 %v1243, 8388608
    %v1245 = vsub.s32 0, %v1244
    %v1246 = vadd.s32 %v1241, 1
    %vm1247 = vcmp.gt.s32.totalorder %v1246, 0
    %v1248 = vsel %vm1247, %v1246, 0
    %v1249 = vshrl.u32 %v1248, 5
    %v1250 = vand.u32 %v1248, 31
    %v1251 = vsub.s32 32, %v1250
    %v1252 = vshrl.u32 683565275, %v1251
    %v1253 = vshll.u32 683565275, %v1250
    %v1254 = vshrl.u32 2475754826, %v1251
    %v1255 = vor.u32 %v1253, %v1254
    %v1256 = vshll.u32 2475754826, %v1250
    %v1257 = vshrl.u32 2131351028, %v1251
    %v1258 = vor.u32 %v1256, %v1257
    %v1259 = vshll.u32 2131351028, %v1250
    %v1260 = vshrl.u32 2102212464, %v1251
    %v1261 = vor.u32 %v1259, %v1260
    %v1262 = vshll.u32 2102212464, %v1250
    %v1263 = vshrl.u32 920167782, %v1251
    %v1264 = vor.u32 %v1262, %v1263
    %v1265 = vshll.u32 920167782, %v1250
    %v1266 = vshrl.u32 1326507024, %v1251
    %v1267 = vor.u32 %v1265, %v1266
    %vm1268 = vcmp.lt.s32.totalorder %v1249, 1
    %vm1269 = vcmp.lt.s32.totalorder %v1249, 2
    %vm1270 = vcmp.lt.s32.totalorder %v1249, 3
    %vm1271 = vcmp.lt.s32.totalorder %v1249, 4
    %v1272 = vsel %vm1268, %v1252, %v1255
    %v1273 = vsel %vm1271, %v1261, 2102212464
    %v1274 = vsel %vm1270, %v1258, %v1273
    %v1275 = vsel %vm1269, %v1272, %v1274
    %v1276 = vsel %vm1268, %v1255, %v1258
    %v1277 = vsel %vm1271, %v1264, 920167782
    %v1278 = vsel %vm1270, %v1261, %v1277
    %v1279 = vsel %vm1269, %v1276, %v1278
    %v1280 = vsel %vm1268, %v1258, %v1261
    %v1281 = vsel %vm1271, %v1267, 1326507024
    %v1282 = vsel %vm1270, %v1264, %v1281
    %v1283 = vsel %vm1269, %v1280, %v1282
    %v1284 = vshll.u32 %v1244, 8
    %v1285 = vmul.u32.u64.compose %v1284, %v1283
    %v1286 = vextract.low.u32 %v1285
    %v1287 = vextract.high.u32 %v1285
    %v1288 = vmul.u32.u64.compose %v1284, %v1279
    %v1289 = vextract.low.u32 %v1288
    %v1290 = vextract.high.u32 %v1288
    %v1291 = vmul.u32 %v1284, %v1275
    %v1292 = vadd.s32 %v1287, %v1289
    %vm1293 = vc.u32 %v1287, %v1289
    %v1294 = vadd.s32 %v1290, 1
    %v1295 = vsel %vm1293, %v1294, %v1290
    %v1296 = vadd.s32 %v1291, %v1295
    %v1297 = vadd.s32 %v1296, 536870912
    %v1298 = vshrl.u32 %v1297, 30
    %v1299 = vshll.u32 %v1298, 30
    %v1300 = vsub.s32 %v1296, %v1299
    %vm1301 = vcmp.lt.s32.totalorder %v1300, 0
    %v1302 = vsub.s32 0, %v1300
    %v1303 = vsel %vm1301, %v1302, %v1300
    %v1304 = vclz %v1303
    %v1305 = vsub.s32 %v1304, 2
    %vm1306 = vcmp.gt.s32.totalorder 0, %v1305
    %v1307 = vsel %vm1306, 0, %v1305
    %v1308 = vsub.s32 32, %v1307
    %v1309 = vshll.u32 %v1300, %v1307
    %v1310 = vshrl.u32 %v1292, %v1308
    %v1311 = vor.u32 %v1309, %v1310
    %v1312 = vsub.s32 4294967266, %v1307
    %v1313 = vadd.s32 %v1312, 127
    %v1314 = vshll.u32 %v1313, 23
    %v1315 = vor.u32 4788187, %v1314
    %v1316 = vand.u32 2147483647, %v1315
    %v1318 = vcvt.s32.f32 %v1311
    %v1319 = vmul.f32 %v1318, %v1316
    %v1320 = vxor.u32 %v1319, 2147483648
    %v1321 = vsel %vm1238, %v1320, %v1319
    %v1322 = vsub.s32 4, %v1298
    %v1323 = vsel %vm1238, %v1322, %v1298
    %v1324 = vsel %vm1237, %v90, %v1321
    %v1325 = vsel %vm1237, 0, %v1323
    %v1326 = vcosq.f32.pop %v1324
    %v1327 = vsinq.f32.pop %v1324
    %vm1328 = vweird.f32 %v90
    %v1329 = vand.u32 %v1325, 3
    %vm1330 = vcmp.lt.s32.totalorder %v1329, 2
    %vm1331 = vcmp.eq.s32.totalorder %v1329, 0
    %v1332 = vxor.u32 %v1327, 2147483648
    %v1333 = vsel %vm1331, %v1326, %v1332
    %vm1334 = vcmp.eq.s32.totalorder %v1329, 2
    %v1335 = vxor.u32 %v1326, 2147483648
    %v1336 = vsel %vm1334, %v1335, %v1327
    %v1337 = vsel %vm1330, %v1333, %v1336
    %v1338 = vsel %vm1328, nan, %v1337
    %v1339 = vand.u32 2147483647, %v91
    %vm1340 = vcmp.le.f32.partialorder %v1339, 0.7853982
    %vm1341 = vcmp.lt.s32.totalorder %v91, 0
    %v1342 = vand.u32 %v91, 2139095040
    %v1343 = vshrl.u32 %v1342, 23
    %v1344 = vsub.s32 %v1343, 127
    %v1345 = vand.u32 2147483647, %v91
    %v1346 = vand.u32 %v1345, 8388607
    %v1347 = vor.u32 %v1346, 8388608
    %v1348 = vsub.s32 0, %v1347
    %v1349 = vadd.s32 %v1344, 1
    %vm1350 = vcmp.gt.s32.totalorder %v1349, 0
    %v1351 = vsel %vm1350, %v1349, 0
    %v1352 = vshrl.u32 %v1351, 5
    %v1353 = vand.u32 %v1351, 31
    %v1354 = vsub.s32 32, %v1353
    %v1355 = vshrl.u32 683565275, %v1354
    %v1356 = vshll.u32 683565275, %v1353
    %v1357 = vshrl.u32 2475754826, %v1354
    %v1358 = vor.u32 %v1356, %v1357
    %v1359 = vshll.u32 2475754826, %v1353
    %v1360 = vshrl.u32 2131351028, %v1354
    %v1361 = vor.u32 %v1359, %v1360
    %v1362 = vshll.u32 2131351028, %v1353
    %v1363 = vshrl.u32 2102212464, %v1354
    %v1364 = vor.u32 %v1362, %v1363
    %v1365 = vshll.u32 2102212464, %v1353
    %v1366 = vshrl.u32 920167782, %v1354
    %v1367 = vor.u32 %v1365, %v1366
    %v1368 = vshll.u32 920167782, %v1353
    %v1369 = vshrl.u32 1326507024, %v1354
    %v1370 = vor.u32 %v1368, %v1369
    %vm1371 = vcmp.lt.s32.totalorder %v1352, 1
    %vm1372 = vcmp.lt.s32.totalorder %v1352, 2
    %vm1373 = vcmp.lt.s32.totalorder %v1352, 3
    %vm1374 = vcmp.lt.s32.totalorder %v1352, 4
    %v1375 = vsel %vm1371, %v1355, %v1358
    %v1376 = vsel %vm1374, %v1364, 2102212464
    %v1377 = vsel %vm1373, %v1361, %v1376
    %v1378 = vsel %vm1372, %v1375, %v1377
    %v1379 = vsel %vm1371, %v1358, %v1361
    %v1380 = vsel %vm1374, %v1367, 920167782
    %v1381 = vsel %vm1373, %v1364, %v1380
    %v1382 = vsel %vm1372, %v1379, %v1381
    %v1383 = vsel %vm1371, %v1361, %v1364
    %v1384 = vsel %vm1374, %v1370, 1326507024
    %v1385 = vsel %vm1373, %v1367, %v1384
    %v1386 = vsel %vm1372, %v1383, %v1385
    %v1387 = vshll.u32 %v1347, 8
    %v1388 = vmul.u32.u64.compose %v1387, %v1386
    %v1389 = vextract.low.u32 %v1388
    %v1390 = vextract.high.u32 %v1388
    %v1391 = vmul.u32.u64.compose %v1387, %v1382
    %v1392 = vextract.low.u32 %v1391
    %v1393 = vextract.high.u32 %v1391
    %v1394 = vmul.u32 %v1387, %v1378
    %v1395 = vadd.s32 %v1390, %v1392
    %vm1396 = vc.u32 %v1390, %v1392
    %v1397 = vadd.s32 %v1393, 1
    %v1398 = vsel %vm1396, %v1397, %v1393
    %v1399 = vadd.s32 %v1394, %v1398
    %v1400 = vadd.s32 %v1399, 536870912
    %v1401 = vshrl.u32 %v1400, 30
    %v1402 = vshll.u32 %v1401, 30
    %v1403 = vsub.s32 %v1399, %v1402
    %vm1404 = vcmp.lt.s32.totalorder %v1403, 0
    %v1405 = vsub.s32 0, %v1403
    %v1406 = vsel %vm1404, %v1405, %v1403
    %v1407 = vclz %v1406
    %v1408 = vsub.s32 %v1407, 2
    %vm1409 = vcmp.gt.s32.totalorder 0, %v1408
    %v1410 = vsel %vm1409, 0, %v1408
    %v1411 = vsub.s32 32, %v1410
    %v1412 = vshll.u32 %v1403, %v1410
    %v1413 = vshrl.u32 %v1395, %v1411
    %v1414 = vor.u32 %v1412, %v1413
    %v1415 = vsub.s32 4294967266, %v1410
    %v1416 = vadd.s32 %v1415, 127
    %v1417 = vshll.u32 %v1416, 23
    %v1418 = vor.u32 4788187, %v1417
    %v1419 = vand.u32 2147483647, %v1418
    %v1421 = vcvt.s32.f32 %v1414
    %v1422 = vmul.f32 %v1421, %v1419
    %v1423 = vxor.u32 %v1422, 2147483648
    %v1424 = vsel %vm1341, %v1423, %v1422
    %v1425 = vsub.s32 4, %v1401
    %v1426 = vsel %vm1341, %v1425, %v1401
    %v1427 = vsel %vm1340, %v91, %v1424
    %v1428 = vsel %vm1340, 0, %v1426
    %v1429 = vcosq.f32.pop %v1427
    %v1430 = vsinq.f32.pop %v1427
    %vm1431 = vweird.f32 %v91
    %v1432 = vand.u32 %v1428, 3
    %vm1433 = vcmp.lt.s32.totalorder %v1432, 2
    %vm1434 = vcmp.eq.s32.totalorder %v1432, 0
    %v1435 = vxor.u32 %v1430, 2147483648
    %v1436 = vsel %vm1434, %v1429, %v1435
    %vm1437 = vcmp.eq.s32.totalorder %v1432, 2
    %v1438 = vxor.u32 %v1429, 2147483648
    %v1439 = vsel %vm1437, %v1438, %v1430
    %v1440 = vsel %vm1433, %v1436, %v1439
    %v1441 = vsel %vm1431, nan, %v1440
    %v1442 = vand.u32 2147483647, %v92
    %vm1443 = vcmp.le.f32.partialorder %v1442, 0.7853982
    %vm1444 = vcmp.lt.s32.totalorder %v92, 0
    %v1445 = vand.u32 %v92, 2139095040
    %v1446 = vshrl.u32 %v1445, 23
    %v1447 = vsub.s32 %v1446, 127
    %v1448 = vand.u32 2147483647, %v92
    %v1449 = vand.u32 %v1448, 8388607
    %v1450 = vor.u32 %v1449, 8388608
    %v1451 = vsub.s32 0, %v1450
    %v1452 = vadd.s32 %v1447, 1
    %vm1453 = vcmp.gt.s32.totalorder %v1452, 0
    %v1454 = vsel %vm1453, %v1452, 0
    %v1455 = vshrl.u32 %v1454, 5
    %v1456 = vand.u32 %v1454, 31
    %v1457 = vsub.s32 32, %v1456
    %v1458 = vshrl.u32 683565275, %v1457
    %v1459 = vshll.u32 683565275, %v1456
    %v1460 = vshrl.u32 2475754826, %v1457
    %v1461 = vor.u32 %v1459, %v1460
    %v1462 = vshll.u32 2475754826, %v1456
    %v1463 = vshrl.u32 2131351028, %v1457
    %v1464 = vor.u32 %v1462, %v1463
    %v1465 = vshll.u32 2131351028, %v1456
    %v1466 = vshrl.u32 2102212464, %v1457
    %v1467 = vor.u32 %v1465, %v1466
    %v1468 = vshll.u32 2102212464, %v1456
    %v1469 = vshrl.u32 920167782, %v1457
    %v1470 = vor.u32 %v1468, %v1469
    %v1471 = vshll.u32 920167782, %v1456
    %v1472 = vshrl.u32 1326507024, %v1457
    %v1473 = vor.u32 %v1471, %v1472
    %vm1474 = vcmp.lt.s32.totalorder %v1455, 1
    %vm1475 = vcmp.lt.s32.totalorder %v1455, 2
    %vm1476 = vcmp.lt.s32.totalorder %v1455, 3
    %vm1477 = vcmp.lt.s32.totalorder %v1455, 4
    %v1478 = vsel %vm1474, %v1458, %v1461
    %v1479 = vsel %vm1477, %v1467, 2102212464
    %v1480 = vsel %vm1476, %v1464, %v1479
    %v1481 = vsel %vm1475, %v1478, %v1480
    %v1482 = vsel %vm1474, %v1461, %v1464
    %v1483 = vsel %vm1477, %v1470, 920167782
    %v1484 = vsel %vm1476, %v1467, %v1483
    %v1485 = vsel %vm1475, %v1482, %v1484
    %v1486 = vsel %vm1474, %v1464, %v1467
    %v1487 = vsel %vm1477, %v1473, 1326507024
    %v1488 = vsel %vm1476, %v1470, %v1487
    %v1489 = vsel %vm1475, %v1486, %v1488
    %v1490 = vshll.u32 %v1450, 8
    %v1491 = vmul.u32.u64.compose %v1490, %v1489
    %v1492 = vextract.low.u32 %v1491
    %v1493 = vextract.high.u32 %v1491
    %v1494 = vmul.u32.u64.compose %v1490, %v1485
    %v1495 = vextract.low.u32 %v1494
    %v1496 = vextract.high.u32 %v1494
    %v1497 = vmul.u32 %v1490, %v1481
    %v1498 = vadd.s32 %v1493, %v1495
    %vm1499 = vc.u32 %v1493, %v1495
    %v1500 = vadd.s32 %v1496, 1
    %v1501 = vsel %vm1499, %v1500, %v1496
    %v1502 = vadd.s32 %v1497, %v1501
    %v1503 = vadd.s32 %v1502, 536870912
    %v1504 = vshrl.u32 %v1503, 30
    %v1505 = vshll.u32 %v1504, 30
    %v1506 = vsub.s32 %v1502, %v1505
    %vm1507 = vcmp.lt.s32.totalorder %v1506, 0
    %v1508 = vsub.s32 0, %v1506
    %v1509 = vsel %vm1507, %v1508, %v1506
    %v1510 = vclz %v1509
    %v1511 = vsub.s32 %v1510, 2
    %vm1512 = vcmp.gt.s32.totalorder 0, %v1511
    %v1513 = vsel %vm1512, 0, %v1511
    %v1514 = vsub.s32 32, %v1513
    %v1515 = vshll.u32 %v1506, %v1513
    %v1516 = vshrl.u32 %v1498, %v1514
    %v1517 = vor.u32 %v1515, %v1516
    %v1518 = vsub.s32 4294967266, %v1513
    %v1519 = vadd.s32 %v1518, 127
    %v1520 = vshll.u32 %v1519, 23
    %v1521 = vor.u32 4788187, %v1520
    %v1522 = vand.u32 2147483647, %v1521
    %v1524 = vcvt.s32.f32 %v1517
    %v1525 = vmul.f32 %v1524, %v1522
    %v1526 = vxor.u32 %v1525, 2147483648
    %v1527 = vsel %vm1444, %v1526, %v1525
    %v1528 = vsub.s32 4, %v1504
    %v1529 = vsel %vm1444, %v1528, %v1504
    %v1530 = vsel %vm1443, %v92, %v1527
    %v1531 = vsel %vm1443, 0, %v1529
    %v1532 = vcosq.f32.pop %v1530
    %v1533 = vsinq.f32.pop %v1530
    %vm1534 = vweird.f32 %v92
    %v1535 = vand.u32 %v1531, 3
    %vm1536 = vcmp.lt.s32.totalorder %v1535, 2
    %vm1537 = vcmp.eq.s32.totalorder %v1535, 0
    %v1538 = vxor.u32 %v1533, 2147483648
    %v1539 = vsel %vm1537, %v1532, %v1538
    %vm1540 = vcmp.eq.s32.totalorder %v1535, 2
    %v1541 = vxor.u32 %v1532, 2147483648
    %v1542 = vsel %vm1540, %v1541, %v1533
    %v1543 = vsel %vm1536, %v1539, %v1542
    %v1544 = vsel %vm1534, nan, %v1543
    %v1545 = vand.u32 2147483647, %v93
    %vm1546 = vcmp.le.f32.partialorder %v1545, 0.7853982
    %vm1547 = vcmp.lt.s32.totalorder %v93, 0
    %v1548 = vand.u32 %v93, 2139095040
    %v1549 = vshrl.u32 %v1548, 23
    %v1550 = vsub.s32 %v1549, 127
    %v1551 = vand.u32 2147483647, %v93
    %v1552 = vand.u32 %v1551, 8388607
    %v1553 = vor.u32 %v1552, 8388608
    %v1554 = vsub.s32 0, %v1553
    %v1555 = vadd.s32 %v1550, 1
    %vm1556 = vcmp.gt.s32.totalorder %v1555, 0
    %v1557 = vsel %vm1556, %v1555, 0
    %v1558 = vshrl.u32 %v1557, 5
    %v1559 = vand.u32 %v1557, 31
    %v1560 = vsub.s32 32, %v1559
    %v1561 = vshrl.u32 683565275, %v1560
    %v1562 = vshll.u32 683565275, %v1559
    %v1563 = vshrl.u32 2475754826, %v1560
    %v1564 = vor.u32 %v1562, %v1563
    %v1565 = vshll.u32 2475754826, %v1559
    %v1566 = vshrl.u32 2131351028, %v1560
    %v1567 = vor.u32 %v1565, %v1566
    %v1568 = vshll.u32 2131351028, %v1559
    %v1569 = vshrl.u32 2102212464, %v1560
    %v1570 = vor.u32 %v1568, %v1569
    %v1571 = vshll.u32 2102212464, %v1559
    %v1572 = vshrl.u32 920167782, %v1560
    %v1573 = vor.u32 %v1571, %v1572
    %v1574 = vshll.u32 920167782, %v1559
    %v1575 = vshrl.u32 1326507024, %v1560
    %v1576 = vor.u32 %v1574, %v1575
    %vm1577 = vcmp.lt.s32.totalorder %v1558, 1
    %vm1578 = vcmp.lt.s32.totalorder %v1558, 2
    %vm1579 = vcmp.lt.s32.totalorder %v1558, 3
    %vm1580 = vcmp.lt.s32.totalorder %v1558, 4
    %v1581 = vsel %vm1577, %v1561, %v1564
    %v1582 = vsel %vm1580, %v1570, 2102212464
    %v1583 = vsel %vm1579, %v1567, %v1582
    %v1584 = vsel %vm1578, %v1581, %v1583
    %v1585 = vsel %vm1577, %v1564, %v1567
    %v1586 = vsel %vm1580, %v1573, 920167782
    %v1587 = vsel %vm1579, %v1570, %v1586
    %v1588 = vsel %vm1578, %v1585, %v1587
    %v1589 = vsel %vm1577, %v1567, %v1570
    %v1590 = vsel %vm1580, %v1576, 1326507024
    %v1591 = vsel %vm1579, %v1573, %v1590
    %v1592 = vsel %vm1578, %v1589, %v1591
    %v1593 = vshll.u32 %v1553, 8
    %v1594 = vmul.u32.u64.compose %v1593, %v1592
    %v1595 = vextract.low.u32 %v1594
    %v1596 = vextract.high.u32 %v1594
    %v1597 = vmul.u32.u64.compose %v1593, %v1588
    %v1598 = vextract.low.u32 %v1597
    %v1599 = vextract.high.u32 %v1597
    %v1600 = vmul.u32 %v1593, %v1584
    %v1601 = vadd.s32 %v1596, %v1598
    %vm1602 = vc.u32 %v1596, %v1598
    %v1603 = vadd.s32 %v1599, 1
    %v1604 = vsel %vm1602, %v1603, %v1599
    %v1605 = vadd.s32 %v1600, %v1604
    %v1606 = vadd.s32 %v1605, 536870912
    %v1607 = vshrl.u32 %v1606, 30
    %v1608 = vshll.u32 %v1607, 30
    %v1609 = vsub.s32 %v1605, %v1608
    %vm1610 = vcmp.lt.s32.totalorder %v1609, 0
    %v1611 = vsub.s32 0, %v1609
    %v1612 = vsel %vm1610, %v1611, %v1609
    %v1613 = vclz %v1612
    %v1614 = vsub.s32 %v1613, 2
    %vm1615 = vcmp.gt.s32.totalorder 0, %v1614
    %v1616 = vsel %vm1615, 0, %v1614
    %v1617 = vsub.s32 32, %v1616
    %v1618 = vshll.u32 %v1609, %v1616
    %v1619 = vshrl.u32 %v1601, %v1617
    %v1620 = vor.u32 %v1618, %v1619
    %v1621 = vsub.s32 4294967266, %v1616
    %v1622 = vadd.s32 %v1621, 127
    %v1623 = vshll.u32 %v1622, 23
    %v1624 = vor.u32 4788187, %v1623
    %v1625 = vand.u32 2147483647, %v1624
    %v1627 = vcvt.s32.f32 %v1620
    %v1628 = vmul.f32 %v1627, %v1625
    %v1629 = vxor.u32 %v1628, 2147483648
    %v1630 = vsel %vm1547, %v1629, %v1628
    %v1631 = vsub.s32 4, %v1607
    %v1632 = vsel %vm1547, %v1631, %v1607
    %v1633 = vsel %vm1546, %v93, %v1630
    %v1634 = vsel %vm1546, 0, %v1632
    %v1635 = vcosq.f32.pop %v1633
    %v1636 = vsinq.f32.pop %v1633
    %vm1637 = vweird.f32 %v93
    %v1638 = vand.u32 %v1634, 3
    %vm1639 = vcmp.lt.s32.totalorder %v1638, 2
    %vm1640 = vcmp.eq.s32.totalorder %v1638, 0
    %v1641 = vxor.u32 %v1636, 2147483648
    %v1642 = vsel %vm1640, %v1635, %v1641
    %vm1643 = vcmp.eq.s32.totalorder %v1638, 2
    %v1644 = vxor.u32 %v1635, 2147483648
    %v1645 = vsel %vm1643, %v1644, %v1636
    %v1646 = vsel %vm1639, %v1642, %v1645
    %v1647 = vsel %vm1637, nan, %v1646
    %v1648 = vand.u32 2147483647, %v94
    %vm1649 = vcmp.le.f32.partialorder %v1648, 0.7853982
    %vm1650 = vcmp.lt.s32.totalorder %v94, 0
    %v1651 = vand.u32 %v94, 2139095040
    %v1652 = vshrl.u32 %v1651, 23
    %v1653 = vsub.s32 %v1652, 127
    %v1654 = vand.u32 2147483647, %v94
    %v1655 = vand.u32 %v1654, 8388607
    %v1656 = vor.u32 %v1655, 8388608
    %v1657 = vsub.s32 0, %v1656
    %v1658 = vadd.s32 %v1653, 1
    %vm1659 = vcmp.gt.s32.totalorder %v1658, 0
    %v1660 = vsel %vm1659, %v1658, 0
    %v1661 = vshrl.u32 %v1660, 5
    %v1662 = vand.u32 %v1660, 31
    %v1663 = vsub.s32 32, %v1662
    %v1664 = vshrl.u32 683565275, %v1663
    %v1665 = vshll.u32 683565275, %v1662
    %v1666 = vshrl.u32 2475754826, %v1663
    %v1667 = vor.u32 %v1665, %v1666
    %v1668 = vshll.u32 2475754826, %v1662
    %v1669 = vshrl.u32 2131351028, %v1663
    %v1670 = vor.u32 %v1668, %v1669
    %v1671 = vshll.u32 2131351028, %v1662
    %v1672 = vshrl.u32 2102212464, %v1663
    %v1673 = vor.u32 %v1671, %v1672
    %v1674 = vshll.u32 2102212464, %v1662
    %v1675 = vshrl.u32 920167782, %v1663
    %v1676 = vor.u32 %v1674, %v1675
    %v1677 = vshll.u32 920167782, %v1662
    %v1678 = vshrl.u32 1326507024, %v1663
    %v1679 = vor.u32 %v1677, %v1678
    %vm1680 = vcmp.lt.s32.totalorder %v1661, 1
    %vm1681 = vcmp.lt.s32.totalorder %v1661, 2
    %vm1682 = vcmp.lt.s32.totalorder %v1661, 3
    %vm1683 = vcmp.lt.s32.totalorder %v1661, 4
    %v1684 = vsel %vm1680, %v1664, %v1667
    %v1685 = vsel %vm1683, %v1673, 2102212464
    %v1686 = vsel %vm1682, %v1670, %v1685
    %v1687 = vsel %vm1681, %v1684, %v1686
    %v1688 = vsel %vm1680, %v1667, %v1670
    %v1689 = vsel %vm1683, %v1676, 920167782
    %v1690 = vsel %vm1682, %v1673, %v1689
    %v1691 = vsel %vm1681, %v1688, %v1690
    %v1692 = vsel %vm1680, %v1670, %v1673
    %v1693 = vsel %vm1683, %v1679, 1326507024
    %v1694 = vsel %vm1682, %v1676, %v1693
    %v1695 = vsel %vm1681, %v1692, %v1694
    %v1696 = vshll.u32 %v1656, 8
    %v1697 = vmul.u32.u64.compose %v1696, %v1695
    %v1698 = vextract.low.u32 %v1697
    %v1699 = vextract.high.u32 %v1697
    %v1700 = vmul.u32.u64.compose %v1696, %v1691
    %v1701 = vextract.low.u32 %v1700
    %v1702 = vextract.high.u32 %v1700
    %v1703 = vmul.u32 %v1696, %v1687
    %v1704 = vadd.s32 %v1699, %v1701
    %vm1705 = vc.u32 %v1699, %v1701
    %v1706 = vadd.s32 %v1702, 1
    %v1707 = vsel %vm1705, %v1706, %v1702
    %v1708 = vadd.s32 %v1703, %v1707
    %v1709 = vadd.s32 %v1708, 536870912
    %v1710 = vshrl.u32 %v1709, 30
    %v1711 = vshll.u32 %v1710, 30
    %v1712 = vsub.s32 %v1708, %v1711
    %vm1713 = vcmp.lt.s32.totalorder %v1712, 0
    %v1714 = vsub.s32 0, %v1712
    %v1715 = vsel %vm1713, %v1714, %v1712
    %v1716 = vclz %v1715
    %v1717 = vsub.s32 %v1716, 2
    %vm1718 = vcmp.gt.s32.totalorder 0, %v1717
    %v1719 = vsel %vm1718, 0, %v1717
    %v1720 = vsub.s32 32, %v1719
    %v1721 = vshll.u32 %v1712, %v1719
    %v1722 = vshrl.u32 %v1704, %v1720
    %v1723 = vor.u32 %v1721, %v1722
    %v1724 = vsub.s32 4294967266, %v1719
    %v1725 = vadd.s32 %v1724, 127
    %v1726 = vshll.u32 %v1725, 23
    %v1727 = vor.u32 4788187, %v1726
    %v1728 = vand.u32 2147483647, %v1727
    %v1730 = vcvt.s32.f32 %v1723
    %v1731 = vmul.f32 %v1730, %v1728
    %v1732 = vxor.u32 %v1731, 2147483648
    %v1733 = vsel %vm1650, %v1732, %v1731
    %v1734 = vsub.s32 4, %v1710
    %v1735 = vsel %vm1650, %v1734, %v1710
    %v1736 = vsel %vm1649, %v94, %v1733
    %v1737 = vsel %vm1649, 0, %v1735
    %v1738 = vcosq.f32.pop %v1736
    %v1739 = vsinq.f32.pop %v1736
    %vm1740 = vweird.f32 %v94
    %v1741 = vand.u32 %v1737, 3
    %vm1742 = vcmp.lt.s32.totalorder %v1741, 2
    %vm1743 = vcmp.eq.s32.totalorder %v1741, 0
    %v1744 = vxor.u32 %v1739, 2147483648
    %v1745 = vsel %vm1743, %v1738, %v1744
    %vm1746 = vcmp.eq.s32.totalorder %v1741, 2
    %v1747 = vxor.u32 %v1738, 2147483648
    %v1748 = vsel %vm1746, %v1747, %v1739
    %v1749 = vsel %vm1742, %v1745, %v1748
    %v1750 = vsel %vm1740, nan, %v1749
    %v1753 = vrot.slane %v198, 5
    %v1754 = vrot.slane %v302, 5
    %v1759 = vrot.slane %v1029, 2
    %v1760 = vrot.slane %v1132, 2
    %v1763 = vrot.slane %v198, 2
    %v1764 = vrot.slane %v302, 2
    %v1767 = vrot.slane %v1029, 7
    %v1768 = vrot.slane %v1132, 7
    %v1773 = vrot.slane %v198, 7
    %v1774 = vrot.slane %v302, 7
    %v1775 = vrot.slane %v406, 7
    %v1776 = vsel %vm48, %v1773, %v1775
    %v1777 = vrot.slane %v510, 7
    %v1778 = vsel %vm48, %v1774, %v1777
    %v1785 = vrot.slane %v1029, 4
    %v1786 = vrot.slane %v1235, 4
    %v1787 = vsel %vm51, %v1785, %v1786
    %v1788 = vrot.slane %v1132, 4
    %v1789 = vrot.slane %v1338, 4
    %v1790 = vsel %vm51, %v1788, %v1789
    %v1793 = vrot.slane %v406, 4
    %v1794 = vrot.slane %v510, 4
    %v1797 = vrot.slane %v1235, 1
    %v1798 = vrot.slane %v1338, 1
    %v1801 = vrot.slane %v406, 1
    %v1802 = vrot.slane %v510, 1
    %v1805 = vrot.slane %v1235, 6
    %v1806 = vrot.slane %v1338, 6
    %v1811 = vrot.slane %v406, 6
    %v1812 = vrot.slane %v614, 6
    %v1813 = vsel %vm57, %v1811, %v1812
    %v1814 = vrot.slane %v510, 6
    %v1815 = vrot.slane %v718, 6
    %v1816 = vsel %vm57, %v1814, %v1815
    %v1821 = vrot.slane %v1235, 3
    %v1822 = vrot.slane %v1441, 3
    %v1823 = vsel %vm60, %v1821, %v1822
    %v1824 = vrot.slane %v1338, 3
    %v1825 = vrot.slane %v1544, 3
    %v1826 = vsel %vm60, %v1824, %v1825
    %v1829 = vrot.slane %v614, 3
    %v1830 = vrot.slane %v718, 3
    %v1833 = vsel %vm42, %v12, %v1753
    %v1834 = vsel %vm42, %v14, %v1754
    %v1835 = vsel %vm45, %v1833, %v1759
    %v1836 = vsel %vm45, %v1834, %v1760
    %v1837 = vsel %vm48, %v1759, %v1763
    %v1838 = vsel %vm48, %v1760, %v1764
    %v1839 = vsel %vm51, %v1837, %v1767
    %v1840 = vsel %vm51, %v1838, %v1768
    %v1841 = vsel %vm54, %v1839, %v1773
    %v1842 = vsel %vm54, %v1840, %v1774
    %v1843 = vsel %vm57, %v1776, %v1787
    %v1844 = vsel %vm57, %v1778, %v1790
    %v1845 = vsel %vm60, %v1843, %v1793
    %v1846 = vsel %vm60, %v1844, %v1794
    %v1847 = vsel %vm42, %v1797, %v1801
    %v1848 = vsel %vm42, %v1798, %v1802
    %v1849 = vsel %vm45, %v1847, %v1805
    %v1850 = vsel %vm45, %v1848, %v1806
    %v1851 = vsel %vm48, %v1805, %v1813
    %v1852 = vsel %vm48, %v1806, %v1816
    %v1853 = vsel %vm51, %v1851, %v1823
    %v1854 = vsel %vm51, %v1852, %v1826
    %v1855 = vsel %vm54, %v1853, %v1829
    %v1856 = vsel %vm54, %v1854, %v1830
    %v1857 = vsel %vm57, %v1829, %v1441
    %v1858 = vsel %vm57, %v1830, %v1544
    %v1859 = vsel %vm60, %v1857, %v614
    %v1860 = vsel %vm60, %v1858, %v718
    %v1861 = vrot.slane %v1441, 5
    %v1862 = vrot.slane %v1544, 5
    %v1867 = vrot.slane %v822, 5
    %v1868 = vrot.slane %v926, 5
    %v1873 = vrot.slane %v1647, 2
    %v1874 = vrot.slane %v1750, 2
    %v1877 = vrot.slane %v822, 2
    %v1878 = vrot.slane %v926, 2
    %v1881 = vrot.slane %v1647, 7
    %v1882 = vrot.slane %v1750, 7
    %v1885 = vsel %vm42, %v1861, %v1867
    %v1886 = vsel %vm42, %v1862, %v1868
    %v1887 = vsel %vm45, %v1885, %v1873
    %v1888 = vsel %vm45, %v1886, %v1874
    %v1889 = vsel %vm48, %v1873, %v1877
    %v1890 = vsel %vm48, %v1874, %v1878
    %v1891 = vsel %vm51, %v1889, %v1881
    %v1892 = vsel %vm51, %v1890, %v1882
    %1893 = vst [vmem:[#allocation2] sm:$0xff] %v1835
    %1894 = vst [vmem:[#allocation2 + $0x8] sm:$0xff] %v1836
    %1895 = vst [vmem:[#allocation2 + $0x10] sm:$0xff] %v1841
    %1896 = vst [vmem:[#allocation2 + $0x18] sm:$0xff] %v1842
    %1897 = vst [vmem:[#allocation2 + $0x20] sm:$0xff] %v1845
    %1898 = vst [vmem:[#allocation2 + $0x28] sm:$0xff] %v1846
    %1899 = vst [vmem:[#allocation2 + $0x30] sm:$0xff] %v1849
    %1900 = vst [vmem:[#allocation2 + $0x38] sm:$0xff] %v1850
    %1901 = vst [vmem:[#allocation2 + $0x40] sm:$0xff] %v1855
    %1902 = vst [vmem:[#allocation2 + $0x48] sm:$0xff] %v1856
    %1903 = vst [vmem:[#allocation2 + $0x50] sm:$0xff] %v1859
    %1904 = vst [vmem:[#allocation2 + $0x58] sm:$0xff] %v1860
    %1905 = vst [vmem:[#allocation2 + $0x60] sm:$0xff] %v1887
    %1906 = vst [vmem:[#allocation2 + $0x68] sm:$0xff] %v1888
    %1907 = vst [vmem:[#allocation2 + $0x70] sm:$0x7f] %v1891
    %1908 = vst [vmem:[#allocation2 + $0x78] sm:$0x7f] %v1892
    // Predicated region
    $region10: #{tpu_custom_call.1} parent=1 // pred_check
      _
    $region11: #{tpu_custom_call.1} parent=1 // pred_check_branch
      %1910 = sbr.rel (0) target = $region13
    $region12: #{tpu_custom_call.1} parent=1 // pred_region
      %s1912 = ssub.s32 2048, 2048
      %1913 = vsyncadd [#allocation3], %s1912
      %s1914 = sshll.u32 [#allocation2], 4
      %s1915 = int_to_ptr.vmem [resolvable:$true] %s1914
      %1920 = dma.vmem_to_hbm [thread:$0]  %s1915, 2048, %s2, [#allocation3], 256, 256, 16
    $region13: #{tpu_custom_call.1} parent=1 // pred_fallthru
      _
    // Predicated region
    $region14: #{tpu_custom_call.1} parent=1 // pred_check
      _
    $region15: #{tpu_custom_call.1} parent=1 // pred_check_branch
      %1922 = sbr.rel (0) target = $region17
    $region16: #{tpu_custom_call.1} parent=1 // pred_region
      %1923 = dma.done [#allocation3], 2048
    $region17: #{tpu_custom_call.1} parent=1 // pred_fallthru
      _
    %1924 = vsyncpa [#allocation3], 1

</llo_original>
